<compile_context>
chip_gen: v7x
topology: tpu7x:2x2x1
jax: 0.10.0
libtpu: 0.0.40
codegen_flags: <defaults>
</compile_context>

<pallas_src>
import numpy as np
import jax
import jax.numpy as jnp
from jax.experimental import pallas as pl
from jax.experimental.pallas import tpu as pltpu


def cnn_with_attention_forward(x_nchw, params):
    (w1, b1, w2, b2, wq, bq, wk, bk, wv, bv, wfc, bfc) = params
    B, Cin, H, W = x_nchw.shape
    assert H % 4 == 0 and W % 4 == 0
    C1, C2, A = 64, 32, 16
    H1, W1 = H // 2, W // 2          # conv1 + pool output spatial
    H2, W2 = H1 // 2, W1 // 2        # conv2 + pool output spatial
    HW = H2 * W2
    N1 = B * H1 * W1                 # rows of pooled conv1 output
    K1 = 9 * Cin
    assert wfc.shape[1] == C2 * HW   # fc expects C2 * (H/4) * (W/4) features

    # ---------------- host-side prep (all tiny, cheap XLA ops) ----------------
    x = jnp.transpose(x_nchw, (0, 2, 3, 1)).astype(jnp.float32)       # NHWC
    xp = jnp.pad(x, ((0, 0), (1, 1), (1, 1), (0, 0)))                 # [B,H+2,W+2,Cin]

    # conv1 im2col with the four 2x2-pool positions stacked along M.
    # Row order within each pool position: (b, i, j); K order: (kh, kw, cin).
    pool_slabs = []
    for py in range(2):
        for px in range(2):
            taps = [xp[:, py + kh: py + kh + 2 * H1 - 1: 2,
                        px + kw: px + kw + 2 * W1 - 1: 2, :]
                    for kh in range(3) for kw in range(3)]
            slab = jnp.concatenate(taps, axis=-1)                     # [B,H1,W1,K1]
            pool_slabs.append(slab.reshape(N1, K1))
    patches1 = jnp.concatenate(pool_slabs, axis=0).astype(jnp.bfloat16)  # [4*N1,K1]

    w1_flat = jnp.transpose(w1, (2, 3, 1, 0)).reshape(K1, C1).astype(jnp.bfloat16)
    b1_row = b1.reshape(1, C1).astype(jnp.float32)
    # conv2 weights split per tap: w2_taps[kh*3+kw] = w2[:, :, kh, kw].T  -> [C1,C2]
    w2_taps = jnp.transpose(w2, (2, 3, 1, 0)).reshape(9, C1, C2).astype(jnp.float32)
    b2_row = b2.reshape(1, C2).astype(jnp.float32)
    # packed q|k|v 1x1-conv weights -> a single [C2, A+A+C2] matmul in-kernel
    wqkv = jnp.concatenate([wq.reshape(A, C2).T, wk.reshape(A, C2).T,
                            wv.reshape(C2, C2).T], axis=1).astype(jnp.float32)
    bqkv = jnp.concatenate([bq, bk, bv]).reshape(1, 2 * A + C2).astype(jnp.float32)
    # block-diagonal additive mask so attention runs as ONE matmul over B*HW rows
    eye = jnp.eye(B, dtype=jnp.float32)
    attn_mask = (1.0 - jnp.repeat(jnp.repeat(eye, HW, axis=0), HW, axis=1)) * (-1e9)
    # fc weight reordered so NCHW flatten == sum(out_rows * wfc_full), tiled over batch
    wfc_r = wfc.reshape(C2, HW).T.astype(jnp.float32)                 # [HW, C2]
    wfc_full = jnp.tile(wfc_r, (B, 1))                                # [B*HW, C2]
    bfc_row = bfc.reshape(1, 1).astype(jnp.float32)

    def kernel(p1_ref, w1_ref, b1_ref, w2_ref, b2_ref, wqkv_ref, bqkv_ref,
               mask_ref, wfc_ref, bfc_ref, o_ref, y1pad_ref):
        # ---------- conv1: single matmul, max over the 4 stacked pool blocks ----------
        r1 = jnp.dot(p1_ref[...], w1_ref[...],
                     preferred_element_type=jnp.float32)              # [4*N1, C1]
        mmax = jnp.maximum(jnp.maximum(r1[0 * N1:1 * N1], r1[1 * N1:2 * N1]),
                           jnp.maximum(r1[2 * N1:3 * N1], r1[3 * N1:4 * N1]))
        y1 = jnp.maximum(mmax + b1_ref[...], 0.0)                     # [N1, C1] rows (b,i,j)

        # ---------- write y1 into the zero-padded scratch (border + 1 block store) ----
        zr = jnp.zeros((B, 1, W1 + 2, C1), jnp.float32)
        zc = jnp.zeros((B, H1 + 2, 1, C1), jnp.float32)
        y1pad_ref[:, 0:1, :, :] = zr
        y1pad_ref[:, H1 + 1:H1 + 2, :, :] = zr
        y1pad_ref[:, :, 0:1, :] = zc
        y1pad_ref[:, :, W1 + 1:W1 + 2, :] = zc
        y1pad_ref[:, 1:H1 + 1, 1:W1 + 1, :] = y1.reshape(B, H1, W1, C1)

        # ---------- conv2: 9 accumulating dots on contiguous windows, full res ----------
        acc2 = jnp.zeros((B * H1 * W1, C2), jnp.float32)
        for t in range(9):
            kh, kw = t // 3, t % 3
            slab = y1pad_ref[:, kh:kh + H1, kw:kw + W1, :]            # [B,H1,W1,C1]
            acc2 = acc2 + jnp.dot(slab.reshape(B * H1 * W1, C1), w2_ref[t],
                                  preferred_element_type=jnp.float32)

        # ---------- 2x2 max-pool (px then py), bias + ReLU hoisted after the max ----------
        z3 = acc2.reshape(B * H1 * W2, 2, C2)                         # (..., px, c)
        m1 = jnp.maximum(z3[:, 0, :], z3[:, 1, :])                    # rows (b,a,py,d)
        z4 = m1.reshape(B * H2, 2, W2, C2)                            # (b*H2+a, py, d, c)
        m2 = jnp.maximum(z4[:, 0, :, :], z4[:, 1, :, :])              # [B*H2, W2, C2]
        y2 = jnp.maximum(m2.reshape(B * HW, C2) + b2_ref[...], 0.0)   # [B*HW, C2]

        # ---------- batched self-attention (packed q|k|v, block-diagonal mask) ----------
        qkv = jnp.dot(y2, wqkv_ref[...],
                      preferred_element_type=jnp.float32) + bqkv_ref[...]
        q = qkv[:, 0:A]
        k = qkv[:, A:2 * A]
        v = qkv[:, 2 * A:2 * A + C2]
        s = jax.lax.dot_general(q, k, (((1,), (1,)), ((), ())),
                                preferred_element_type=jnp.float32) + mask_ref[...]
        s = s - jnp.max(s, axis=-1, keepdims=True)
        e = jnp.exp(s)
        att = e * pl.reciprocal(jnp.sum(e, axis=-1, keepdims=True), approx=True)
        ob = jnp.dot(att, v, preferred_element_type=jnp.float32)      # [B*HW, C2]

        # ---------- fc (flatten folded into wfc_full) + sigmoid, single store ----------
        prod = ob * wfc_ref[...]                                      # [B*HW, C2]
        row_sums = jnp.sum(prod, axis=-1, keepdims=True)              # [B*HW, 1]
        logits = jnp.sum(row_sums.reshape(B, HW), axis=-1,
                         keepdims=True) + bfc_ref[...]                # [B, 1]
        o_ref[...] = 1.0 / (1.0 + jnp.exp(-logits))

    vmem = pl.BlockSpec(memory_space=pltpu.MemorySpace.VMEM)
    return pl.pallas_call(
        kernel,
        out_shape=jax.ShapeDtypeStruct((B, 1), jnp.float32),
        in_specs=[vmem] * 10,
        out_specs=vmem,
        scratch_shapes=[
            pltpu.VMEM((B, H1 + 2, W1 + 2, C1), jnp.float32),   # zero-padded y1
        ],
    )(patches1, w1_flat, b1_row, w2_taps, b2_row, wqkv, bqkv,
      attn_mask, wfc_full, bfc_row)


# ----------------------------------------------------------------------------
# Pure-JAX reference (mirrors the PyTorch forward exactly, full f32)
# ----------------------------------------------------------------------------
def reference_forward(x, params):
    (w1, b1, w2, b2, wq, bq, wk, bk, wv, bv, wfc, bfc) = params

    def conv(x, w, b, pad):
        y = jax.lax.conv_general_dilated(
            x, w, window_strides=(1, 1), padding=[(pad, pad), (pad, pad)],
            dimension_numbers=('NCHW', 'OIHW', 'NCHW'))
        return y + b[None, :, None, None]

    def maxpool(x):
        return jax.lax.reduce_window(x, -jnp.inf, jax.lax.max,
                                     (1, 1, 2, 2), (1, 1, 2, 2), 'VALID')

    y = maxpool(jax.nn.relu(conv(x, w1, b1, 1)))
    y = maxpool(jax.nn.relu(conv(y, w2, b2, 1)))
    B, C, H, W = y.shape
    q = conv(y, wq, bq, 0).reshape(B, -1, H * W).transpose(0, 2, 1)
    k = conv(y, wk, bk, 0).reshape(B, -1, H * W)
    att = jax.nn.softmax(jnp.einsum('bpa,baq->bpq', q, k), axis=-1)
    v = conv(y, wv, bv, 0).reshape(B, -1, H * W)
    out = jnp.einsum('bcq,bpq->bcp', v, att).reshape(B, C, H, W)
    feat = out.reshape(B, -1)
    return jax.nn.sigmoid(feat @ wfc.T + bfc)


if __name__ == "__main__":
    key = jax.random.PRNGKey(0)
    ks = jax.random.split(key, 13)
    # fc expects 128 features = 32 * (H/4) * (W/4)  ->  H = W = 8
    B, Cin, H, W = 2, 4, 8, 8
    x = jax.random.normal(ks[0], (B, Cin, H, W), jnp.float32)

    def init(k, shape, scale):
        return scale * jax.random.normal(k, shape, jnp.float32)

    params = (
        init(ks[1], (64, Cin, 3, 3), 0.15), init(ks[2], (64,), 0.05),   # conv1
        init(ks[3], (32, 64, 3, 3), 0.08),  init(ks[4], (32,), 0.05),   # conv2
        init(ks[5], (16, 32, 1, 1), 0.15),  init(ks[6], (16,), 0.05),   # attn query
        init(ks[7], (16, 32, 1, 1), 0.15),  init(ks[8], (16,), 0.05),   # attn key
        init(ks[9], (32, 32, 1, 1), 0.15),  init(ks[10], (32,), 0.05),  # attn value
        init(ks[11], (1, 128), 0.1),        init(ks[12], (1,), 0.05),   # fc
    )

    out = jax.jit(cnn_with_attention_forward)(x, params)
    out = jax.block_until_ready(out)

    ref = reference_forward(x, params)
    np.testing.assert_allclose(np.asarray(out), np.asarray(ref), rtol=1e-2, atol=1e-2)
    print("KERNEL_OK")
</pallas_src>

<mosaic_0001>
module attributes {stable_mosaic.version = 11 : i64} {
  func.func @kernel(%arg0: memref<128x36xbf16, #tpu.memory_space<vmem>>, %arg1: memref<36x64xbf16, #tpu.memory_space<vmem>>, %arg2: memref<1x64xf32, #tpu.memory_space<vmem>>, %arg3: memref<9x64x32xf32, #tpu.memory_space<vmem>>, %arg4: memref<1x32xf32, #tpu.memory_space<vmem>>, %arg5: memref<32x64xf32, #tpu.memory_space<vmem>>, %arg6: memref<1x64xf32, #tpu.memory_space<vmem>>, %arg7: memref<8x8xf32, #tpu.memory_space<vmem>>, %arg8: memref<8x32xf32, #tpu.memory_space<vmem>>, %arg9: memref<1x1xf32, #tpu.memory_space<vmem>>, %arg10: memref<2x1xf32, #tpu.memory_space<vmem>>, %arg11: memref<2x6x6x64xf32, #tpu.memory_space<vmem>>) attributes {dimension_semantics = [], scalar_prefetch = 0 : i64, scratch_operands = 1 : i64, tpu.core_type = #tpu.core_type<tc>} {
    %c0 = arith.constant 0 : index
    %c0_0 = arith.constant 0 : index
    %0 = vector.load %arg0[%c0, %c0_0] : memref<128x36xbf16, #tpu.memory_space<vmem>>, vector<128x36xbf16>
    %c0_1 = arith.constant 0 : index
    %c0_2 = arith.constant 0 : index
    %1 = vector.load %arg1[%c0_1, %c0_2] : memref<36x64xbf16, #tpu.memory_space<vmem>>, vector<36x64xbf16>
    %cst = arith.constant dense<0.000000e+00> : vector<128x64xf32>
    %2 = tpu.matmul %0, %1, %cst {dimension_numbers = #tpu.dot_dimension_numbers<[1], [0], [0], [1], [0, 0, 1, 1], [], []>} : vector<128x36xbf16>, vector<36x64xbf16>, vector<128x64xf32> -> vector<128x64xf32>
    %3 = vector.extract_strided_slice %2 {offsets = [0, 0], sizes = [32, 64], strides = [1, 1]} : vector<128x64xf32> to vector<32x64xf32>
    %4 = vector.extract_strided_slice %2 {offsets = [32, 0], sizes = [32, 64], strides = [1, 1]} : vector<128x64xf32> to vector<32x64xf32>
    %5 = arith.maximumf %3, %4 : vector<32x64xf32>
    %6 = vector.extract_strided_slice %2 {offsets = [64, 0], sizes = [32, 64], strides = [1, 1]} : vector<128x64xf32> to vector<32x64xf32>
    %7 = vector.extract_strided_slice %2 {offsets = [96, 0], sizes = [32, 64], strides = [1, 1]} : vector<128x64xf32> to vector<32x64xf32>
    %8 = arith.maximumf %6, %7 : vector<32x64xf32>
    %9 = arith.maximumf %5, %8 : vector<32x64xf32>
    %c0_3 = arith.constant 0 : index
    %c0_4 = arith.constant 0 : index
    %10 = vector.load %arg2[%c0_3, %c0_4] : memref<1x64xf32, #tpu.memory_space<vmem>>, vector<1x64xf32>
    %11 = vector.broadcast %10 : vector<1x64xf32> to vector<32x64xf32>
    %12 = arith.addf %9, %11 : vector<32x64xf32>
    %cst_5 = arith.constant 0.000000e+00 : f32
    %13 = vector.broadcast %cst_5 : f32 to vector<32x64xf32>
    %14 = arith.maximumf %12, %13 : vector<32x64xf32>
    %cst_6 = arith.constant 0.000000e+00 : f32
    %15 = vector.broadcast %cst_6 : f32 to vector<2x1x6x64xf32>
    %cst_7 = arith.constant 0.000000e+00 : f32
    %16 = vector.broadcast %cst_7 : f32 to vector<2x6x1x64xf32>
    %c0_8 = arith.constant 0 : index
    %c0_9 = arith.constant 0 : index
    %c0_10 = arith.constant 0 : index
    %c0_11 = arith.constant 0 : index
    %17 = vector.load %arg11[%c0_8, %c0_9, %c0_10, %c0_11] : memref<2x6x6x64xf32, #tpu.memory_space<vmem>>, vector<2x1x6x64xf32>
    tpu.vector_store %arg11[%c0_8, %c0_9, %c0_10, %c0_11], %15 {strides = array<i32>} : memref<2x6x6x64xf32, #tpu.memory_space<vmem>>, vector<2x1x6x64xf32>,
    %c0_12 = arith.constant 0 : index
    %c5 = arith.constant 5 : index
    %c0_13 = arith.constant 0 : index
    %c0_14 = arith.constant 0 : index
    %18 = vector.load %arg11[%c0_12, %c5, %c0_13, %c0_14] : memref<2x6x6x64xf32, #tpu.memory_space<vmem>>, vector<2x1x6x64xf32>
    tpu.vector_store %arg11[%c0_12, %c5, %c0_13, %c0_14], %15 {strides = array<i32>} : memref<2x6x6x64xf32, #tpu.memory_space<vmem>>, vector<2x1x6x64xf32>,
    %c0_15 = arith.constant 0 : index
    %c0_16 = arith.constant 0 : index
    %c0_17 = arith.constant 0 : index
    %c0_18 = arith.constant 0 : index
    %19 = vector.load %arg11[%c0_15, %c0_16, %c0_17, %c0_18] : memref<2x6x6x64xf32, #tpu.memory_space<vmem>>, vector<2x6x1x64xf32>
    tpu.vector_store %arg11[%c0_15, %c0_16, %c0_17, %c0_18], %16 {strides = array<i32>} : memref<2x6x6x64xf32, #tpu.memory_space<vmem>>, vector<2x6x1x64xf32>,
    %c0_19 = arith.constant 0 : index
    %c0_20 = arith.constant 0 : index
    %c5_21 = arith.constant 5 : index
    %c0_22 = arith.constant 0 : index
    %20 = vector.load %arg11[%c0_19, %c0_20, %c5_21, %c0_22] : memref<2x6x6x64xf32, #tpu.memory_space<vmem>>, vector<2x6x1x64xf32>
    tpu.vector_store %arg11[%c0_19, %c0_20, %c5_21, %c0_22], %16 {strides = array<i32>} : memref<2x6x6x64xf32, #tpu.memory_space<vmem>>, vector<2x6x1x64xf32>,
    %21 = vector.shape_cast %14 : vector<32x64xf32> to vector<2x4x4x64xf32>
    %c0_23 = arith.constant 0 : index
    %c1 = arith.constant 1 : index
    %c1_24 = arith.constant 1 : index
    %c0_25 = arith.constant 0 : index
    %22 = vector.load %arg11[%c0_23, %c1, %c1_24, %c0_25] : memref<2x6x6x64xf32, #tpu.memory_space<vmem>>, vector<2x4x4x64xf32>
    tpu.vector_store %arg11[%c0_23, %c1, %c1_24, %c0_25], %21 {strides = array<i32>} : memref<2x6x6x64xf32, #tpu.memory_space<vmem>>, vector<2x4x4x64xf32>,
    %cst_26 = arith.constant 0.000000e+00 : f32
    %23 = vector.broadcast %cst_26 : f32 to vector<32x32xf32>
    %c0_27 = arith.constant 0 : index
    %c0_28 = arith.constant 0 : index
    %c0_29 = arith.constant 0 : index
    %c0_30 = arith.constant 0 : index
    %24 = vector.load %arg11[%c0_27, %c0_28, %c0_29, %c0_30] : memref<2x6x6x64xf32, #tpu.memory_space<vmem>>, vector<2x4x4x64xf32>
    %25 = vector.shape_cast %24 : vector<2x4x4x64xf32> to vector<32x64xf32>
    %c0_31 = arith.constant 0 : index
    %c0_32 = arith.constant 0 : index
    %c0_33 = arith.constant 0 : index
    %26 = vector.load %arg3[%c0_31, %c0_32, %c0_33] : memref<9x64x32xf32, #tpu.memory_space<vmem>>, vector<1x64x32xf32>
    %27 = vector.shape_cast %26 : vector<1x64x32xf32> to vector<64x32xf32>
    %cst_34 = arith.constant dense<0.000000e+00> : vector<32x32xf32>
    %28 = tpu.matmul %25, %27, %cst_34 {dimension_numbers = #tpu.dot_dimension_numbers<[1], [0], [0], [1], [0, 0, 1, 1], [], []>} : vector<32x64xf32>, vector<64x32xf32>, vector<32x32xf32> -> vector<32x32xf32>
    %29 = arith.addf %23, %28 : vector<32x32xf32>
    %c0_35 = arith.constant 0 : index
    %c0_36 = arith.constant 0 : index
    %c1_37 = arith.constant 1 : index
    %c0_38 = arith.constant 0 : index
    %30 = vector.load %arg11[%c0_35, %c0_36, %c1_37, %c0_38] : memref<2x6x6x64xf32, #tpu.memory_space<vmem>>, vector<2x4x4x64xf32>
    %31 = vector.shape_cast %30 : vector<2x4x4x64xf32> to vector<32x64xf32>
    %c1_39 = arith.constant 1 : index
    %c0_40 = arith.constant 0 : index
    %c0_41 = arith.constant 0 : index
    %32 = vector.load %arg3[%c1_39, %c0_40, %c0_41] : memref<9x64x32xf32, #tpu.memory_space<vmem>>, vector<1x64x32xf32>
    %33 = vector.shape_cast %32 : vector<1x64x32xf32> to vector<64x32xf32>
    %cst_42 = arith.constant dense<0.000000e+00> : vector<32x32xf32>
    %34 = tpu.matmul %31, %33, %cst_42 {dimension_numbers = #tpu.dot_dimension_numbers<[1], [0], [0], [1], [0, 0, 1, 1], [], []>} : vector<32x64xf32>, vector<64x32xf32>, vector<32x32xf32> -> vector<32x32xf32>
    %35 = arith.addf %29, %34 : vector<32x32xf32>
    %c0_43 = arith.constant 0 : index
    %c0_44 = arith.constant 0 : index
    %c2 = arith.constant 2 : index
    %c0_45 = arith.constant 0 : index
    %36 = vector.load %arg11[%c0_43, %c0_44, %c2, %c0_45] : memref<2x6x6x64xf32, #tpu.memory_space<vmem>>, vector<2x4x4x64xf32>
    %37 = vector.shape_cast %36 : vector<2x4x4x64xf32> to vector<32x64xf32>
    %c2_46 = arith.constant 2 : index
    %c0_47 = arith.constant 0 : index
    %c0_48 = arith.constant 0 : index
    %38 = vector.load %arg3[%c2_46, %c0_47, %c0_48] : memref<9x64x32xf32, #tpu.memory_space<vmem>>, vector<1x64x32xf32>
    %39 = vector.shape_cast %38 : vector<1x64x32xf32> to vector<64x32xf32>
    %cst_49 = arith.constant dense<0.000000e+00> : vector<32x32xf32>
    %40 = tpu.matmul %37, %39, %cst_49 {dimension_numbers = #tpu.dot_dimension_numbers<[1], [0], [0], [1], [0, 0, 1, 1], [], []>} : vector<32x64xf32>, vector<64x32xf32>, vector<32x32xf32> -> vector<32x32xf32>
    %41 = arith.addf %35, %40 : vector<32x32xf32>
    %c0_50 = arith.constant 0 : index
    %c1_51 = arith.constant 1 : index
    %c0_52 = arith.constant 0 : index
    %c0_53 = arith.constant 0 : index
    %42 = vector.load %arg11[%c0_50, %c1_51, %c0_52, %c0_53] : memref<2x6x6x64xf32, #tpu.memory_space<vmem>>, vector<2x4x4x64xf32>
    %43 = vector.shape_cast %42 : vector<2x4x4x64xf32> to vector<32x64xf32>
    %c3 = arith.constant 3 : index
    %c0_54 = arith.constant 0 : index
    %c0_55 = arith.constant 0 : index
    %44 = vector.load %arg3[%c3, %c0_54, %c0_55] : memref<9x64x32xf32, #tpu.memory_space<vmem>>, vector<1x64x32xf32>
    %45 = vector.shape_cast %44 : vector<1x64x32xf32> to vector<64x32xf32>
    %cst_56 = arith.constant dense<0.000000e+00> : vector<32x32xf32>
    %46 = tpu.matmul %43, %45, %cst_56 {dimension_numbers = #tpu.dot_dimension_numbers<[1], [0], [0], [1], [0, 0, 1, 1], [], []>} : vector<32x64xf32>, vector<64x32xf32>, vector<32x32xf32> -> vector<32x32xf32>
    %47 = arith.addf %41, %46 : vector<32x32xf32>
    %c0_57 = arith.constant 0 : index
    %c1_58 = arith.constant 1 : index
    %c1_59 = arith.constant 1 : index
    %c0_60 = arith.constant 0 : index
    %48 = vector.load %arg11[%c0_57, %c1_58, %c1_59, %c0_60] : memref<2x6x6x64xf32, #tpu.memory_space<vmem>>, vector<2x4x4x64xf32>
    %49 = vector.shape_cast %48 : vector<2x4x4x64xf32> to vector<32x64xf32>
    %c4 = arith.constant 4 : index
    %c0_61 = arith.constant 0 : index
    %c0_62 = arith.constant 0 : index
    %50 = vector.load %arg3[%c4, %c0_61, %c0_62] : memref<9x64x32xf32, #tpu.memory_space<vmem>>, vector<1x64x32xf32>
    %51 = vector.shape_cast %50 : vector<1x64x32xf32> to vector<64x32xf32>
    %cst_63 = arith.constant dense<0.000000e+00> : vector<32x32xf32>
    %52 = tpu.matmul %49, %51, %cst_63 {dimension_numbers = #tpu.dot_dimension_numbers<[1], [0], [0], [1], [0, 0, 1, 1], [], []>} : vector<32x64xf32>, vector<64x32xf32>, vector<32x32xf32> -> vector<32x32xf32>
    %53 = arith.addf %47, %52 : vector<32x32xf32>
    %c0_64 = arith.constant 0 : index
    %c1_65 = arith.constant 1 : index
    %c2_66 = arith.constant 2 : index
    %c0_67 = arith.constant 0 : index
    %54 = vector.load %arg11[%c0_64, %c1_65, %c2_66, %c0_67] : memref<2x6x6x64xf32, #tpu.memory_space<vmem>>, vector<2x4x4x64xf32>
    %55 = vector.shape_cast %54 : vector<2x4x4x64xf32> to vector<32x64xf32>
    %c5_68 = arith.constant 5 : index
    %c0_69 = arith.constant 0 : index
    %c0_70 = arith.constant 0 : index
    %56 = vector.load %arg3[%c5_68, %c0_69, %c0_70] : memref<9x64x32xf32, #tpu.memory_space<vmem>>, vector<1x64x32xf32>
    %57 = vector.shape_cast %56 : vector<1x64x32xf32> to vector<64x32xf32>
    %cst_71 = arith.constant dense<0.000000e+00> : vector<32x32xf32>
    %58 = tpu.matmul %55, %57, %cst_71 {dimension_numbers = #tpu.dot_dimension_numbers<[1], [0], [0], [1], [0, 0, 1, 1], [], []>} : vector<32x64xf32>, vector<64x32xf32>, vector<32x32xf32> -> vector<32x32xf32>
    %59 = arith.addf %53, %58 : vector<32x32xf32>
    %c0_72 = arith.constant 0 : index
    %c2_73 = arith.constant 2 : index
    %c0_74 = arith.constant 0 : index
    %c0_75 = arith.constant 0 : index
    %60 = vector.load %arg11[%c0_72, %c2_73, %c0_74, %c0_75] : memref<2x6x6x64xf32, #tpu.memory_space<vmem>>, vector<2x4x4x64xf32>
    %61 = vector.shape_cast %60 : vector<2x4x4x64xf32> to vector<32x64xf32>
    %c6 = arith.constant 6 : index
    %c0_76 = arith.constant 0 : index
    %c0_77 = arith.constant 0 : index
    %62 = vector.load %arg3[%c6, %c0_76, %c0_77] : memref<9x64x32xf32, #tpu.memory_space<vmem>>, vector<1x64x32xf32>
    %63 = vector.shape_cast %62 : vector<1x64x32xf32> to vector<64x32xf32>
    %cst_78 = arith.constant dense<0.000000e+00> : vector<32x32xf32>
    %64 = tpu.matmul %61, %63, %cst_78 {dimension_numbers = #tpu.dot_dimension_numbers<[1], [0], [0], [1], [0, 0, 1, 1], [], []>} : vector<32x64xf32>, vector<64x32xf32>, vector<32x32xf32> -> vector<32x32xf32>
    %65 = arith.addf %59, %64 : vector<32x32xf32>
    %c0_79 = arith.constant 0 : index
    %c2_80 = arith.constant 2 : index
    %c1_81 = arith.constant 1 : index
    %c0_82 = arith.constant 0 : index
    %66 = vector.load %arg11[%c0_79, %c2_80, %c1_81, %c0_82] : memref<2x6x6x64xf32, #tpu.memory_space<vmem>>, vector<2x4x4x64xf32>
    %67 = vector.shape_cast %66 : vector<2x4x4x64xf32> to vector<32x64xf32>
    %c7 = arith.constant 7 : index
    %c0_83 = arith.constant 0 : index
    %c0_84 = arith.constant 0 : index
    %68 = vector.load %arg3[%c7, %c0_83, %c0_84] : memref<9x64x32xf32, #tpu.memory_space<vmem>>, vector<1x64x32xf32>
    %69 = vector.shape_cast %68 : vector<1x64x32xf32> to vector<64x32xf32>
    %cst_85 = arith.constant dense<0.000000e+00> : vector<32x32xf32>
    %70 = tpu.matmul %67, %69, %cst_85 {dimension_numbers = #tpu.dot_dimension_numbers<[1], [0], [0], [1], [0, 0, 1, 1], [], []>} : vector<32x64xf32>, vector<64x32xf32>, vector<32x32xf32> -> vector<32x32xf32>
    %71 = arith.addf %65, %70 : vector<32x32xf32>
    %c0_86 = arith.constant 0 : index
    %c2_87 = arith.constant 2 : index
    %c2_88 = arith.constant 2 : index
    %c0_89 = arith.constant 0 : index
    %72 = vector.load %arg11[%c0_86, %c2_87, %c2_88, %c0_89] : memref<2x6x6x64xf32, #tpu.memory_space<vmem>>, vector<2x4x4x64xf32>
    %73 = vector.shape_cast %72 : vector<2x4x4x64xf32> to vector<32x64xf32>
    %c8 = arith.constant 8 : index
    %c0_90 = arith.constant 0 : index
    %c0_91 = arith.constant 0 : index
    %74 = vector.load %arg3[%c8, %c0_90, %c0_91] : memref<9x64x32xf32, #tpu.memory_space<vmem>>, vector<1x64x32xf32>
    %75 = vector.shape_cast %74 : vector<1x64x32xf32> to vector<64x32xf32>
    %cst_92 = arith.constant dense<0.000000e+00> : vector<32x32xf32>
    %76 = tpu.matmul %73, %75, %cst_92 {dimension_numbers = #tpu.dot_dimension_numbers<[1], [0], [0], [1], [0, 0, 1, 1], [], []>} : vector<32x64xf32>, vector<64x32xf32>, vector<32x32xf32> -> vector<32x32xf32>
    %77 = arith.addf %71, %76 : vector<32x32xf32>
    %78 = vector.shape_cast %77 : vector<32x32xf32> to vector<16x2x32xf32>
    %79 = vector.extract_strided_slice %78 {offsets = [0, 0, 0], sizes = [16, 1, 32], strides = [1, 1, 1]} : vector<16x2x32xf32> to vector<16x1x32xf32>
    %80 = vector.shape_cast %79 : vector<16x1x32xf32> to vector<16x32xf32>
    %81 = vector.extract_strided_slice %78 {offsets = [0, 1, 0], sizes = [16, 1, 32], strides = [1, 1, 1]} : vector<16x2x32xf32> to vector<16x1x32xf32>
    %82 = vector.shape_cast %81 : vector<16x1x32xf32> to vector<16x32xf32>
    %83 = arith.maximumf %80, %82 : vector<16x32xf32>
    %84 = vector.shape_cast %83 : vector<16x32xf32> to vector<4x2x2x32xf32>
    %85 = vector.extract_strided_slice %84 {offsets = [0, 0, 0, 0], sizes = [4, 1, 2, 32], strides = [1, 1, 1, 1]} : vector<4x2x2x32xf32> to vector<4x1x2x32xf32>
    %86 = vector.shape_cast %85 : vector<4x1x2x32xf32> to vector<4x2x32xf32>
    %87 = vector.extract_strided_slice %84 {offsets = [0, 1, 0, 0], sizes = [4, 1, 2, 32], strides = [1, 1, 1, 1]} : vector<4x2x2x32xf32> to vector<4x1x2x32xf32>
    %88 = vector.shape_cast %87 : vector<4x1x2x32xf32> to vector<4x2x32xf32>
    %89 = arith.maximumf %86, %88 : vector<4x2x32xf32>
    %90 = vector.shape_cast %89 : vector<4x2x32xf32> to vector<8x32xf32>
    %c0_93 = arith.constant 0 : index
    %c0_94 = arith.constant 0 : index
    %91 = vector.load %arg4[%c0_93, %c0_94] : memref<1x32xf32, #tpu.memory_space<vmem>>, vector<1x32xf32>
    %92 = vector.broadcast %91 : vector<1x32xf32> to vector<8x32xf32>
    %93 = arith.addf %90, %92 : vector<8x32xf32>
    %cst_95 = arith.constant 0.000000e+00 : f32
    %94 = vector.broadcast %cst_95 : f32 to vector<8x32xf32>
    %95 = arith.maximumf %93, %94 : vector<8x32xf32>
    %c0_96 = arith.constant 0 : index
    %c0_97 = arith.constant 0 : index
    %96 = vector.load %arg5[%c0_96, %c0_97] : memref<32x64xf32, #tpu.memory_space<vmem>>, vector<32x64xf32>
    %cst_98 = arith.constant dense<0.000000e+00> : vector<8x64xf32>
    %97 = tpu.matmul %95, %96, %cst_98 {dimension_numbers = #tpu.dot_dimension_numbers<[1], [0], [0], [1], [0, 0, 1, 1], [], []>} : vector<8x32xf32>, vector<32x64xf32>, vector<8x64xf32> -> vector<8x64xf32>
    %c0_99 = arith.constant 0 : index
    %c0_100 = arith.constant 0 : index
    %98 = vector.load %arg6[%c0_99, %c0_100] : memref<1x64xf32, #tpu.memory_space<vmem>>, vector<1x64xf32>
    %99 = vector.broadcast %98 : vector<1x64xf32> to vector<8x64xf32>
    %100 = arith.addf %97, %99 : vector<8x64xf32>
    %101 = vector.extract_strided_slice %100 {offsets = [0, 0], sizes = [8, 16], strides = [1, 1]} : vector<8x64xf32> to vector<8x16xf32>
    %102 = vector.extract_strided_slice %100 {offsets = [0, 16], sizes = [8, 16], strides = [1, 1]} : vector<8x64xf32> to vector<8x16xf32>
    %103 = vector.extract_strided_slice %100 {offsets = [0, 32], sizes = [8, 32], strides = [1, 1]} : vector<8x64xf32> to vector<8x32xf32>
    %cst_101 = arith.constant dense<0.000000e+00> : vector<8x8xf32>
    %104 = tpu.matmul %101, %102, %cst_101 {dimension_numbers = #tpu.dot_dimension_numbers<[1], [1], [0], [0], [0, 0, 1, 0], [], []>} : vector<8x16xf32>, vector<8x16xf32>, vector<8x8xf32> -> vector<8x8xf32>
    %c0_102 = arith.constant 0 : index
    %c0_103 = arith.constant 0 : index
    %105 = vector.load %arg7[%c0_102, %c0_103] : memref<8x8xf32, #tpu.memory_space<vmem>>, vector<8x8xf32>
    %106 = arith.addf %104, %105 : vector<8x8xf32>
    %cst_104 = arith.constant dense<0xFF800000> : vector<8xf32>
    %107 = vector.multi_reduction <maximumf>, %106, %cst_104 [1] : vector<8x8xf32> to vector<8xf32>
    %108 = vector.shape_cast %107 : vector<8xf32> to vector<8x1xf32>
    %109 = vector.broadcast %108 : vector<8x1xf32> to vector<8x8xf32>
    %110 = arith.subf %106, %109 : vector<8x8xf32>
    %111 = math.exp %110 : vector<8x8xf32>
    %cst_105 = arith.constant dense<0.000000e+00> : vector<8xf32>
    %112 = vector.multi_reduction <add>, %111, %cst_105 [1] : vector<8x8xf32> to vector<8xf32>
    %113 = vector.shape_cast %112 : vector<8xf32> to vector<8x1xf32>
    %114 = tpu.reciprocal %113 {approx = true} : vector<8x1xf32> -> vector<8x1xf32>
    %115 = vector.broadcast %114 : vector<8x1xf32> to vector<8x8xf32>
    %116 = arith.mulf %111, %115 : vector<8x8xf32>
    %cst_106 = arith.constant dense<0.000000e+00> : vector<8x32xf32>
    %117 = tpu.matmul %116, %103, %cst_106 {dimension_numbers = #tpu.dot_dimension_numbers<[1], [0], [0], [1], [0, 0, 1, 1], [], []>} : vector<8x8xf32>, vector<8x32xf32>, vector<8x32xf32> -> vector<8x32xf32>
    %c0_107 = arith.constant 0 : index
    %c0_108 = arith.constant 0 : index
    %118 = vector.load %arg8[%c0_107, %c0_108] : memref<8x32xf32, #tpu.memory_space<vmem>>, vector<8x32xf32>
    %119 = arith.mulf %117, %118 : vector<8x32xf32>
    %cst_109 = arith.constant dense<0.000000e+00> : vector<8xf32>
    %120 = vector.multi_reduction <add>, %119, %cst_109 [1] : vector<8x32xf32> to vector<8xf32>
    %121 = vector.shape_cast %120 : vector<8xf32> to vector<8x1xf32>
    %122 = vector.shape_cast %121 : vector<8x1xf32> to vector<2x4xf32>
    %cst_110 = arith.constant dense<0.000000e+00> : vector<2xf32>
    %123 = vector.multi_reduction <add>, %122, %cst_110 [1] : vector<2x4xf32> to vector<2xf32>
    %124 = vector.shape_cast %123 : vector<2xf32> to vector<2x1xf32>
    %c0_111 = arith.constant 0 : index
    %c0_112 = arith.constant 0 : index
    %125 = vector.load %arg9[%c0_111, %c0_112] : memref<1x1xf32, #tpu.memory_space<vmem>>, vector<1x1xf32>
    %126 = vector.broadcast %125 : vector<1x1xf32> to vector<2x1xf32>
    %127 = arith.addf %124, %126 : vector<2x1xf32>
    %cst_113 = arith.constant 0.000000e+00 : f32
    %128 = vector.broadcast %cst_113 : f32 to vector<2x1xf32>
    %129 = arith.subf %128, %127 : vector<2x1xf32>
    %130 = math.exp %129 : vector<2x1xf32>
    %cst_114 = arith.constant 1.000000e+00 : f32
    %131 = vector.broadcast %cst_114 : f32 to vector<2x1xf32>
    %132 = arith.addf %131, %130 : vector<2x1xf32>
    %cst_115 = arith.constant 1.000000e+00 : f32
    %133 = vector.broadcast %cst_115 : f32 to vector<2x1xf32>
    %134 = arith.divf %133, %132 : vector<2x1xf32>
    %c0_116 = arith.constant 0 : index
    %c0_117 = arith.constant 0 : index
    %135 = vector.load %arg10[%c0_116, %c0_117] : memref<2x1xf32, #tpu.memory_space<vmem>>, vector<2x1xf32>
    tpu.vector_store %arg10[%c0_116, %c0_117], %134 {strides = array<i32>} : memref<2x1xf32, #tpu.memory_space<vmem>>, vector<2x1xf32>,
    return
  }
}

</mosaic_0001>

<llo_original>
// kernel: cnn_with_attention_forward.1
$region0: #{cnn_with_attention_forward.1}
  #allocation0 [shape = 'u32[]', space=smem, size = 0x4, offset = 0x4, fixed_abs, tag = 'smem constant byte address 0x4 - core index']
  #allocation1 [shape = 'u32[144,128]{1,0:T(1,128)}', space=vmem, size = 0x12000, scoped, tag = 'internal scratch']
  #allocation2 [shape = 'f32[2,6,6,64]{3,2,1,0:T(8,128)}', space=vmem, size = 0xc000, scoped, tag = 'scratch operand']
  #allocation3 [shape = 'f32[1,1]{1,0:T(1,128)S(1)}', space=vmem, size = 0x200, scoped, tag = 'scoped memory for cnn_with_attention_forward.1']
  %s0 = inlined_call_operand.vmem [shape: bf16[128,36], index: 0, kind: input, shape index: {}]
  %s1 = inlined_call_operand.vmem [shape: bf16[36,64], index: 1, kind: input, shape index: {}]
  %s2 = inlined_call_operand.vmem [shape: f32[1,64], index: 2, kind: input, shape index: {}]
  %s3 = inlined_call_operand.vmem [shape: f32[9,64,32], index: 3, kind: input, shape index: {}]
  %s4 = inlined_call_operand.vmem [shape: f32[1,32], index: 4, kind: input, shape index: {}]
  %s5 = inlined_call_operand.vmem [shape: f32[32,64], index: 5, kind: input, shape index: {}]
  %s6 = inlined_call_operand.vmem [shape: f32[1,64], index: 6, kind: input, shape index: {}]
  %s7 = inlined_call_operand.vmem [shape: f32[8,8], index: 7, kind: input, shape index: {}]
  %s8 = inlined_call_operand.vmem [shape: f32[8,32], index: 8, kind: input, shape index: {}]
  %s9 = inlined_call_operand.<no memory space> [shape: f32[1,1], index: 9, kind: input, shape index: {}]
  %s10 = inlined_call_operand.vmem [shape: f32[2,1], index: 10, kind: output, shape index: {}]
  %s11 = sld [smem:[#allocation0]]
  $region50: #{cnn_with_attention_forward.1} parent=0
    _
  %s13 = ssub.s32 1, %s11
  %s14 = scalar_select 0, %s13, %s11
  %v15 = vstv %s9
  %16 = vst [vmem:[#allocation3] sm:$0x1] %v15
  // Predicated region
  $region2: #{cnn_with_attention_forward.1} parent=0 // pred_check
    _
  $region3: #{cnn_with_attention_forward.1} parent=0 // pred_check_branch
    %18 = sbr.rel (0) target = $region5
  $region4: #{cnn_with_attention_forward.1} parent=0 // pred_region
    _
  $region5: #{cnn_with_attention_forward.1} parent=0 // pred_fallthru
    _
  // Predicated region
  $region6: #{cnn_with_attention_forward.1} parent=0 // pred_check
    _
  $region7: #{cnn_with_attention_forward.1} parent=0 // pred_check_branch
    %20 = sbr.rel (0) target = $region9
  $region8: #{cnn_with_attention_forward.1} parent=0 // pred_region
    _
  $region9: #{cnn_with_attention_forward.1} parent=0 // pred_fallthru
    _
  // Predicated region
  $region10: #{cnn_with_attention_forward.1} parent=0 // pred_check
    _
  $region11: #{cnn_with_attention_forward.1} parent=0 // pred_check_branch
    %22 = sbr.rel (0) target = $region13
  $region12: #{cnn_with_attention_forward.1} parent=0 // pred_region
    _
  $region13: #{cnn_with_attention_forward.1} parent=0 // pred_fallthru
    _
  // Predicated region
  $region14: #{cnn_with_attention_forward.1} parent=0 // pred_check
    _
  $region15: #{cnn_with_attention_forward.1} parent=0 // pred_check_branch
    %24 = sbr.rel (0) target = $region17
  $region16: #{cnn_with_attention_forward.1} parent=0 // pred_region
    _
  $region17: #{cnn_with_attention_forward.1} parent=0 // pred_fallthru
    _
  // Predicated region
  $region18: #{cnn_with_attention_forward.1} parent=0 // pred_check
    _
  $region19: #{cnn_with_attention_forward.1} parent=0 // pred_check_branch
    %26 = sbr.rel (0) target = $region21
  $region20: #{cnn_with_attention_forward.1} parent=0 // pred_region
    _
  $region21: #{cnn_with_attention_forward.1} parent=0 // pred_fallthru
    _
  // Predicated region
  $region22: #{cnn_with_attention_forward.1} parent=0 // pred_check
    _
  $region23: #{cnn_with_attention_forward.1} parent=0 // pred_check_branch
    %28 = sbr.rel (0) target = $region25
  $region24: #{cnn_with_attention_forward.1} parent=0 // pred_region
    _
  $region25: #{cnn_with_attention_forward.1} parent=0 // pred_fallthru
    _
  // Predicated region
  $region26: #{cnn_with_attention_forward.1} parent=0 // pred_check
    _
  $region27: #{cnn_with_attention_forward.1} parent=0 // pred_check_branch
    %30 = sbr.rel (0) target = $region29
  $region28: #{cnn_with_attention_forward.1} parent=0 // pred_region
    _
  $region29: #{cnn_with_attention_forward.1} parent=0 // pred_fallthru
    _
  // Predicated region
  $region30: #{cnn_with_attention_forward.1} parent=0 // pred_check
    _
  $region31: #{cnn_with_attention_forward.1} parent=0 // pred_check_branch
    %32 = sbr.rel (0) target = $region33
  $region32: #{cnn_with_attention_forward.1} parent=0 // pred_region
    _
  $region33: #{cnn_with_attention_forward.1} parent=0 // pred_fallthru
    _
  // Predicated region
  $region34: #{cnn_with_attention_forward.1} parent=0 // pred_check
    _
  $region35: #{cnn_with_attention_forward.1} parent=0 // pred_check_branch
    %34 = sbr.rel (0) target = $region37
  $region36: #{cnn_with_attention_forward.1} parent=0 // pred_region
    _
  $region37: #{cnn_with_attention_forward.1} parent=0 // pred_fallthru
    _
  // Predicated region
  $region38: #{cnn_with_attention_forward.1} parent=0 // pred_check
    _
  $region39: #{cnn_with_attention_forward.1} parent=0 // pred_check_branch
    %36 = sbr.rel (0) target = $region41
  $region40: #{cnn_with_attention_forward.1} parent=0 // pred_region
    _
  $region41: #{cnn_with_attention_forward.1} parent=0 // pred_fallthru
    _
  %v38 = vld [vmem:[%s0] sm:$0xf]
  %v39 = vld [vmem:[%s0 + $0x4] sm:$0xf]
  %v40 = vld [vmem:[%s0 + $0x8] sm:$0xf]
  %v41 = vld [vmem:[%s0 + $0xc] sm:$0xf]
  %v42 = vld [vmem:[%s0 + $0x10] sm:$0xf]
  %v43 = vld [vmem:[%s0 + $0x14] sm:$0xf]
  %v44 = vld [vmem:[%s0 + $0x18] sm:$0xf]
  %v45 = vld [vmem:[%s0 + $0x1c] sm:$0xf]
  %v46 = vld [vmem:[%s0 + $0x20] sm:$0xf]
  %v47 = vld [vmem:[%s0 + $0x24] sm:$0xf]
  %v48 = vld [vmem:[%s0 + $0x28] sm:$0xf]
  %v49 = vld [vmem:[%s0 + $0x2c] sm:$0xf]
  %v50 = vld [vmem:[%s0 + $0x30] sm:$0xf]
  %v51 = vld [vmem:[%s0 + $0x34] sm:$0xf]
  %v52 = vld [vmem:[%s0 + $0x38] sm:$0xf]
  %v53 = vld [vmem:[%s0 + $0x3c] sm:$0xf]
  %v54 = vld [vmem:[%s1] sm:$0xf]
  %v55 = vld [vmem:[%s1 + $0x4] sm:$0xf]
  %v56 = vld [vmem:[%s1 + $0x8] sm:$0xf]
  %v57 = vld [vmem:[%s1 + $0xc] sm:$0xf]
  %v58 = vld [vmem:[%s1 + $0x10] sm:$0x3]
  %v75 = vunpack.c.l.b16 %v38
  %v76 = vunpack.c.l.b16 %v39
  %v77 = vunpack.c.l.b16 %v40
  %v78 = vunpack.c.l.b16 %v41
  %v79 = vunpack.c.l.b16 %v42
  %v80 = vunpack.c.l.b16 %v43
  %v81 = vunpack.c.l.b16 %v44
  %v82 = vunpack.c.l.b16 %v45
  %v83 = vunpack.c.l.b16 %v46
  %v84 = vunpack.c.l.b16 %v47
  %v85 = vunpack.c.l.b16 %v48
  %v86 = vunpack.c.l.b16 %v49
  %v87 = vunpack.c.l.b16 %v50
  %v88 = vunpack.c.l.b16 %v51
  %v89 = vunpack.c.l.b16 %v52
  %v90 = vunpack.c.l.b16 %v53
  %v91 = vpack.c.b16 %v76, %v75
  %v92 = vpack.c.b16 %v78, %v77
  %v93 = vpack.c.b16 %v80, %v79
  %v94 = vpack.c.b16 %v82, %v81
  %v95 = vpack.c.b16 %v84, %v83
  %v96 = vpack.c.b16 %v86, %v85
  %v97 = vpack.c.b16 %v88, %v87
  %v98 = vpack.c.b16 %v90, %v89
  %v104 = vunpack.c.l.b16 %v54
  %v105 = vunpack.c.l.b16 %v55
  %v106 = vunpack.c.l.b16 %v56
  %v107 = vunpack.c.l.b16 %v57
  %v108 = vunpack.c.l.b16 %v58
  %v109 = vpack.c.b16 %v105, %v104
  %v110 = vpack.c.b16 %v107, %v106
  %v111 = vpack.c.b16 %v108, %v108
  %vm114 = vcmask 293888
  %v116 = vsel %vm114, %v91, 0
  %v119 = vsel %vm114, %v92, 0
  %v122 = vsel %vm114, %v93, 0
  %v125 = vsel %vm114, %v94, 0
  %v128 = vsel %vm114, %v95, 0
  %v131 = vsel %vm114, %v96, 0
  %v134 = vsel %vm114, %v97, 0
  %v137 = vsel %vm114, %v98, 0
  %vm139 = vcmask 1041408
  %v141 = vsel %vm139, %v111, 0
  %143 = vmatprep.subr.bf16.mxu0 0
  %144 = vmatpush1.bf16.msra.mxu0 %v109
  %145 = vmatprep.subr.bf16.mxu0 0
  %146 = vmatpush1.bf16.msra.mxu0 %v110
  %147 = vmatprep.subr.bf16.mxu0 0
  %148 = vmatpush1.bf16.msra.mxu0 %v141
  %149 = vmatprep.subr.bf16.mxu0 0
  %150 = vmatpush1.bf16.msra.mxu0 0
  %151 = vmatprep.subr.bf16.mxu0 0
  %152 = vmatpush1.bf16.msra.mxu0 0
  %153 = vmatprep.subr.bf16.mxu0 0
  %154 = vmatpush1.bf16.msra.mxu0 0
  %155 = vmatprep.subr.bf16.mxu0 0
  %156 = vmatpush1.bf16.msra.mxu0 0
  %157 = vmatprep.subr.bf16.mxu0 0
  %158 = vmatpush1.bf16.msra.mxu0 0
  %159 = vmatprep.subr.bf16.mxu0 0
  %160 = vmatpush1.bf16.msra.mxu0 0
  %161 = vmatprep.subr.bf16.mxu0 0
  %162 = vmatpush1.bf16.msra.mxu0 0
  %163 = vmatprep.subr.bf16.mxu0 0
  %164 = vmatpush1.bf16.msra.mxu0 0
  %165 = vmatprep.subr.bf16.mxu0 0
  %166 = vmatpush1.bf16.msra.mxu0 0
  %167 = vmatprep.subr.bf16.mxu0 0
  %168 = vmatpush1.bf16.msra.mxu0 0
  %169 = vmatprep.subr.bf16.mxu0 0
  %170 = vmatpush1.bf16.msra.mxu0 0
  %171 = vmatprep.subr.bf16.mxu0 0
  %172 = vmatpush1.bf16.msra.mxu0 0
  %173 = vmatprep.subr.bf16.mxu0 0
  %174 = vmatpush1.bf16.msra.mxu0 0
  %175 = vmatprep.mubr.bf16.mxu0 0
  %176 = vmatmul.mubr.bf16.gmra.mrb[0].mxu0 %v116
  %v177 = vpop.f32.mrb[0].mxu0
  %v178 = vadd.f32 0.0, %v177
  %v179 = vpop.f32.mrb[0].mxu0
  %v180 = vpop.f32.mrb[0].mxu0
  %v181 = vadd.f32 0.0, %v180
  %v182 = vpop.f32.mrb[0].mxu0
  %183 = vmatprep.mubr.bf16.mxu0 0
  %184 = vmatmul.mubr.bf16.gmra.mrb[0].mxu0 %v119
  %v185 = vpop.f32.mrb[0].mxu0
  %v186 = vadd.f32 0.0, %v185
  %v187 = vpop.f32.mrb[0].mxu0
  %v188 = vpop.f32.mrb[0].mxu0
  %v189 = vadd.f32 0.0, %v188
  %v190 = vpop.f32.mrb[0].mxu0
  %191 = vmatprep.mubr.bf16.mxu0 0
  %192 = vmatmul.mubr.bf16.gmra.mrb[0].mxu0 %v122
  %v193 = vpop.f32.mrb[0].mxu0
  %v194 = vadd.f32 0.0, %v193
  %v195 = vpop.f32.mrb[0].mxu0
  %v196 = vpop.f32.mrb[0].mxu0
  %v197 = vadd.f32 0.0, %v196
  %v198 = vpop.f32.mrb[0].mxu0
  %199 = vmatprep.mubr.bf16.mxu0 0
  %200 = vmatmul.mubr.bf16.gmra.mrb[0].mxu0 %v125
  %v201 = vpop.f32.mrb[0].mxu0
  %v202 = vadd.f32 0.0, %v201
  %v203 = vpop.f32.mrb[0].mxu0
  %v204 = vpop.f32.mrb[0].mxu0
  %v205 = vadd.f32 0.0, %v204
  %v206 = vpop.f32.mrb[0].mxu0
  %207 = vmatprep.mubr.bf16.mxu0 0
  %208 = vmatmul.mubr.bf16.gmra.mrb[0].mxu0 %v128
  %v209 = vpop.f32.mrb[0].mxu0
  %v210 = vadd.f32 0.0, %v209
  %v211 = vpop.f32.mrb[0].mxu0
  %v212 = vpop.f32.mrb[0].mxu0
  %v213 = vadd.f32 0.0, %v212
  %v214 = vpop.f32.mrb[0].mxu0
  %215 = vmatprep.mubr.bf16.mxu0 0
  %216 = vmatmul.mubr.bf16.gmra.mrb[0].mxu0 %v131
  %v217 = vpop.f32.mrb[0].mxu0
  %v218 = vadd.f32 0.0, %v217
  %v219 = vpop.f32.mrb[0].mxu0
  %v220 = vpop.f32.mrb[0].mxu0
  %v221 = vadd.f32 0.0, %v220
  %v222 = vpop.f32.mrb[0].mxu0
  %223 = vmatprep.mubr.bf16.mxu0 0
  %224 = vmatmul.mubr.bf16.gmra.mrb[0].mxu0 %v134
  %v225 = vpop.f32.mrb[0].mxu0
  %v226 = vadd.f32 0.0, %v225
  %v227 = vpop.f32.mrb[0].mxu0
  %v228 = vpop.f32.mrb[0].mxu0
  %v229 = vadd.f32 0.0, %v228
  %v230 = vpop.f32.mrb[0].mxu0
  %231 = vmatprep.mubr.bf16.mxu0 0
  %232 = vmatmul.mubr.bf16.gmra.mrb[0].mxu0 %v137
  %v233 = vpop.f32.mrb[0].mxu0
  %v234 = vadd.f32 0.0, %v233
  %v235 = vpop.f32.mrb[0].mxu0
  %v236 = vpop.f32.mrb[0].mxu0
  %v237 = vadd.f32 0.0, %v236
  %v238 = vpop.f32.mrb[0].mxu0
  %239 = vdwg.mxu0
  %v240 = vmax.f32 %v178, %v194
  %v241 = vmax.f32 %v181, %v197
  %v242 = vmax.f32 %v186, %v202
  %v243 = vmax.f32 %v189, %v205
  %v244 = vmax.f32 %v210, %v226
  %v245 = vmax.f32 %v213, %v229
  %v246 = vmax.f32 %v218, %v234
  %v247 = vmax.f32 %v221, %v237
  %v248 = vmax.f32 %v240, %v244
  %v249 = vmax.f32 %v241, %v245
  %v250 = vmax.f32 %v242, %v246
  %v251 = vmax.f32 %v243, %v247
  %v252 = vld [vmem:[%s2] sm:$0x1]
  %v254 = vlaneseq
  %v255 = vshrl.u32 %v254, 7
  %v256 = vsub.s32 0, %v255
  %v257 = vrot.slane %v252, %v256
  %v259 = vadd.f32 %v248, %v257
  %v260 = vadd.f32 %v249, %v257
  %v261 = vadd.f32 %v250, %v257
  %v262 = vadd.f32 %v251, %v257
  %v263 = vmax.f32 %v259, 0.0
  %v264 = vmax.f32 %v260, 0.0
  %v265 = vmax.f32 %v261, 0.0
  %v266 = vmax.f32 %v262, 0.0
  %vm267 = vcmask 521216
  %268 = vst.msk [vmem:[#allocation2] sm:$0x3f] %vm267, 0.0
  %269 = vst.msk [vmem:[#allocation2 + $0x30] sm:$0x3f] %vm267, 0.0
  %s270 = scalar_lea.vmem [#allocation2], 40
  %271 = vst.msk [vmem:[%s270] sm:$0x3f] %vm267, 0.0
  %272 = vst.msk [vmem:[%s270 + $0x30] sm:$0x3f] %vm267, 0.0
  %vm273 = vcmask 516096
  %274 = vst.msk [vmem:[#allocation2] sm:$0x1] %vm273, 0.0
  %275 = vst.msk [vmem:[#allocation2 + $0x8] sm:$0x1] %vm273, 0.0
  %276 = vst.msk [vmem:[#allocation2 + $0x10] sm:$0x1] %vm273, 0.0
  %277 = vst.msk [vmem:[#allocation2 + $0x18] sm:$0x1] %vm273, 0.0
  %278 = vst.msk [vmem:[#allocation2 + $0x20] sm:$0x1] %vm273, 0.0
  %279 = vst.msk [vmem:[#allocation2 + $0x28] sm:$0x1] %vm273, 0.0
  %280 = vst.msk [vmem:[#allocation2 + $0x30] sm:$0x1] %vm273, 0.0
  %281 = vst.msk [vmem:[#allocation2 + $0x38] sm:$0x1] %vm273, 0.0
  %282 = vst.msk [vmem:[#allocation2 + $0x40] sm:$0x1] %vm273, 0.0
  %283 = vst.msk [vmem:[#allocation2 + $0x48] sm:$0x1] %vm273, 0.0
  %284 = vst.msk [vmem:[#allocation2 + $0x50] sm:$0x1] %vm273, 0.0
  %285 = vst.msk [vmem:[#allocation2 + $0x58] sm:$0x1] %vm273, 0.0
  %286 = vst.msk [vmem:[#allocation2 + $0x5] sm:$0x1] %vm273, 0.0
  %287 = vst.msk [vmem:[#allocation2 + $0xd] sm:$0x1] %vm273, 0.0
  %288 = vst.msk [vmem:[#allocation2 + $0x15] sm:$0x1] %vm273, 0.0
  %289 = vst.msk [vmem:[#allocation2 + $0x1d] sm:$0x1] %vm273, 0.0
  %290 = vst.msk [vmem:[#allocation2 + $0x25] sm:$0x1] %vm273, 0.0
  %291 = vst.msk [vmem:[#allocation2 + $0x2d] sm:$0x1] %vm273, 0.0
  %292 = vst.msk [vmem:[#allocation2 + $0x35] sm:$0x1] %vm273, 0.0
  %293 = vst.msk [vmem:[#allocation2 + $0x3d] sm:$0x1] %vm273, 0.0
  %294 = vst.msk [vmem:[#allocation2 + $0x45] sm:$0x1] %vm273, 0.0
  %295 = vst.msk [vmem:[#allocation2 + $0x4d] sm:$0x1] %vm273, 0.0
  %296 = vst.msk [vmem:[#allocation2 + $0x55] sm:$0x1] %vm273, 0.0
  %297 = vst.msk [vmem:[#allocation2 + $0x5d] sm:$0x1] %vm273, 0.0
  %v302 = vcombine.high %v263, %v263
  %v303 = vcombine.high %v264, %v264
  %v304 = vcombine.high %v265, %v265
  %v305 = vcombine.high %v266, %v266
  %s310 = scalar_lea.vmem [#allocation2], 8
  %vm311 = vcmask 519168
  %312 = vst.msk [vmem:[%s310 + $0x1] sm:$0xf] %vm311, %v263
  %313 = vst.msk [vmem:[%s310 + $0x9] sm:$0xf] %vm311, %v302
  %314 = vst.msk [vmem:[%s310 + $0x11] sm:$0xf] %vm311, %v264
  %315 = vst.msk [vmem:[%s310 + $0x19] sm:$0xf] %vm311, %v303
  %316 = vst.msk [vmem:[%s310 + $0x31] sm:$0xf] %vm311, %v265
  %317 = vst.msk [vmem:[%s310 + $0x39] sm:$0xf] %vm311, %v304
  %318 = vst.msk [vmem:[%s310 + $0x41] sm:$0xf] %vm311, %v266
  %319 = vst.msk [vmem:[%s310 + $0x49] sm:$0xf] %vm311, %v305
  %v320 = vld [vmem:[#allocation2] sm:$0xf]
  %v321 = vld [vmem:[#allocation2 + $0x8] sm:$0xf]
  %v322 = vld [vmem:[#allocation2 + $0x10] sm:$0xf]
  %v323 = vld [vmem:[#allocation2 + $0x18] sm:$0xf]
  %v324 = vld [vmem:[#allocation2 + $0x30] sm:$0xf]
  %v325 = vld [vmem:[#allocation2 + $0x38] sm:$0xf]
  %v326 = vld [vmem:[#allocation2 + $0x40] sm:$0xf]
  %v327 = vld [vmem:[#allocation2 + $0x48] sm:$0xf]
  %v328 = vld [vmem:[%s3] sm:$0xff]
  %v329 = vld [vmem:[%s3 + $0x8] sm:$0xff]
  %v330 = vld [vmem:[%s3 + $0x10] sm:$0xff]
  %v331 = vld [vmem:[%s3 + $0x18] sm:$0xff]
  %v332 = vld [vmem:[%s3 + $0x20] sm:$0xff]
  %v333 = vld [vmem:[%s3 + $0x28] sm:$0xff]
  %v334 = vld [vmem:[%s3 + $0x30] sm:$0xff]
  %v335 = vld [vmem:[%s3 + $0x38] sm:$0xff]
  %v336 = vld [vmem:[#allocation2 + $0x1] sm:$0xf]
  %v337 = vld [vmem:[#allocation2 + $0x9] sm:$0xf]
  %v338 = vld [vmem:[#allocation2 + $0x11] sm:$0xf]
  %v339 = vld [vmem:[#allocation2 + $0x19] sm:$0xf]
  %v340 = vld [vmem:[#allocation2 + $0x31] sm:$0xf]
  %v341 = vld [vmem:[#allocation2 + $0x39] sm:$0xf]
  %v342 = vld [vmem:[#allocation2 + $0x41] sm:$0xf]
  %v343 = vld [vmem:[#allocation2 + $0x49] sm:$0xf]
  %s344 = scalar_lea.vmem %s3, 64
  %v345 = vld [vmem:[%s344] sm:$0xff]
  %v346 = vld [vmem:[%s344 + $0x8] sm:$0xff]
  %v347 = vld [vmem:[%s344 + $0x10] sm:$0xff]
  %v348 = vld [vmem:[%s344 + $0x18] sm:$0xff]
  %v349 = vld [vmem:[%s344 + $0x20] sm:$0xff]
  %v350 = vld [vmem:[%s344 + $0x28] sm:$0xff]
  %v351 = vld [vmem:[%s344 + $0x30] sm:$0xff]
  %v352 = vld [vmem:[%s344 + $0x38] sm:$0xff]
  %v361 = vcombine.low %v336, %v337
  %v362 = vcombine.low %v338, %v339
  %v363 = vcombine.low %v340, %v341
  %v364 = vcombine.low %v342, %v343
  %vm365 = vcmask 523264
  %v366 = vsel %vm365, %v361, 0
  %v368 = vsel %vm365, %v362, 0
  %v370 = vsel %vm365, %v363, 0
  %v372 = vsel %vm365, %v364, 0
  %374 = vmatprep.subr.mxu0 0.0
  %375 = vmatpush1.msra.mxu0 %v345
  %376 = vmatprep.subr.mxu0 0.0
  %377 = vmatpush1.msra.mxu0 %v346
  %378 = vmatprep.subr.mxu0 0.0
  %379 = vmatpush1.msra.mxu0 %v347
  %380 = vmatprep.subr.mxu0 0.0
  %381 = vmatpush1.msra.mxu0 %v348
  %382 = vmatprep.subr.mxu0 0.0
  %383 = vmatpush1.msra.mxu0 %v349
  %384 = vmatprep.subr.mxu0 0.0
  %385 = vmatpush1.msra.mxu0 %v350
  %386 = vmatprep.subr.mxu0 0.0
  %387 = vmatpush1.msra.mxu0 %v351
  %388 = vmatprep.subr.mxu0 0.0
  %389 = vmatpush1.msra.mxu0 %v352
  %390 = vmatprep.subr.mxu0 0.0
  %391 = vmatpush1.msra.mxu0 0.0
  %392 = vmatprep.subr.mxu0 0.0
  %393 = vmatpush1.msra.mxu0 0.0
  %394 = vmatprep.subr.mxu0 0.0
  %395 = vmatpush1.msra.mxu0 0.0
  %396 = vmatprep.subr.mxu0 0.0
  %397 = vmatpush1.msra.mxu0 0.0
  %398 = vmatprep.subr.mxu0 0.0
  %399 = vmatpush1.msra.mxu0 0.0
  %400 = vmatprep.subr.mxu0 0.0
  %401 = vmatpush1.msra.mxu0 0.0
  %402 = vmatprep.subr.mxu0 0.0
  %403 = vmatpush1.msra.mxu0 0.0
  %404 = vmatprep.subr.mxu0 0.0
  %405 = vmatpush1.msra.mxu0 0.0
  %406 = vmatprep.subr.mxu0 0.0
  %407 = vmatpush1.msra.mxu0 0.0
  %408 = vmatprep.subr.mxu0 0.0
  %409 = vmatpush1.msra.mxu0 0.0
  %410 = vmatprep.subr.mxu0 0.0
  %411 = vmatpush1.msra.mxu0 0.0
  %412 = vmatprep.subr.mxu0 0.0
  %413 = vmatpush1.msra.mxu0 0.0
  %414 = vmatprep.subr.mxu0 0.0
  %415 = vmatpush1.msra.mxu0 0.0
  %416 = vmatprep.subr.mxu0 0.0
  %417 = vmatpush1.msra.mxu0 0.0
  %418 = vmatprep.subr.mxu0 0.0
  %419 = vmatpush1.msra.mxu0 0.0
  %420 = vmatprep.subr.mxu0 0.0
  %421 = vmatpush1.msra.mxu0 0.0
  %422 = vmatprep.subr.mxu0 0.0
  %423 = vmatpush1.msra.mxu0 0.0
  %424 = vmatprep.subr.mxu0 0.0
  %425 = vmatpush1.msra.mxu0 0.0
  %426 = vmatprep.subr.mxu0 0.0
  %427 = vmatpush1.msra.mxu0 0.0
  %428 = vmatprep.subr.mxu0 0.0
  %429 = vmatpush1.msra.mxu0 0.0
  %430 = vmatprep.subr.mxu0 0.0
  %431 = vmatpush1.msra.mxu0 0.0
  %432 = vmatprep.subr.mxu0 0.0
  %433 = vmatpush1.msra.mxu0 0.0
  %434 = vmatprep.subr.mxu0 0.0
  %435 = vmatpush1.msra.mxu0 0.0
  %436 = vmatprep.subr.mxu0 0.0
  %437 = vmatpush1.msra.mxu0 0.0
  %438 = vmatprep.mubr.f32.mxu0 0.0
  %439 = vmatmul.mubr.f32.gmra.mrb[0].mxu0 %v366
  %v440 = vpop.f32.mrb[0].mxu0
  %v441 = vadd.f32 0.0, %v440
  %v442 = vpop.f32.mrb[0].mxu0
  %443 = vmatprep.mubr.f32.mxu0 0.0
  %444 = vmatmul.mubr.f32.gmra.mrb[0].mxu0 %v368
  %v445 = vpop.f32.mrb[0].mxu0
  %v446 = vadd.f32 0.0, %v445
  %v447 = vpop.f32.mrb[0].mxu0
  %448 = vmatprep.mubr.f32.mxu0 0.0
  %449 = vmatmul.mubr.f32.gmra.mrb[0].mxu0 %v370
  %v450 = vpop.f32.mrb[0].mxu0
  %v451 = vadd.f32 0.0, %v450
  %v452 = vpop.f32.mrb[0].mxu0
  %453 = vmatprep.mubr.f32.mxu0 0.0
  %454 = vmatmul.mubr.f32.gmra.mrb[0].mxu0 %v372
  %v455 = vpop.f32.mrb[0].mxu0
  %v456 = vadd.f32 0.0, %v455
  %v457 = vpop.f32.mrb[0].mxu0
  %458 = vdwg.mxu0
  %v467 = vcombine.low %v320, %v321
  %v468 = vcombine.low %v322, %v323
  %v469 = vcombine.low %v324, %v325
  %v470 = vcombine.low %v326, %v327
  %v471 = vsel %vm365, %v467, 0
  %v473 = vsel %vm365, %v468, 0
  %v475 = vsel %vm365, %v469, 0
  %v477 = vsel %vm365, %v470, 0
  %479 = vmatprep.subr.mxu0 0.0
  %480 = vmatpush1.msra.mxu0 %v328
  %481 = vmatprep.subr.mxu0 0.0
  %482 = vmatpush1.msra.mxu0 %v329
  %483 = vmatprep.subr.mxu0 0.0
  %484 = vmatpush1.msra.mxu0 %v330
  %485 = vmatprep.subr.mxu0 0.0
  %486 = vmatpush1.msra.mxu0 %v331
  %487 = vmatprep.subr.mxu0 0.0
  %488 = vmatpush1.msra.mxu0 %v332
  %489 = vmatprep.subr.mxu0 0.0
  %490 = vmatpush1.msra.mxu0 %v333
  %491 = vmatprep.subr.mxu0 0.0
  %492 = vmatpush1.msra.mxu0 %v334
  %493 = vmatprep.subr.mxu0 0.0
  %494 = vmatpush1.msra.mxu0 %v335
  %495 = vmatprep.subr.mxu0 0.0
  %496 = vmatpush1.msra.mxu0 0.0
  %497 = vmatprep.subr.mxu0 0.0
  %498 = vmatpush1.msra.mxu0 0.0
  %499 = vmatprep.subr.mxu0 0.0
  %500 = vmatpush1.msra.mxu0 0.0
  %501 = vmatprep.subr.mxu0 0.0
  %502 = vmatpush1.msra.mxu0 0.0
  %503 = vmatprep.subr.mxu0 0.0
  %504 = vmatpush1.msra.mxu0 0.0
  %505 = vmatprep.subr.mxu0 0.0
  %506 = vmatpush1.msra.mxu0 0.0
  %507 = vmatprep.subr.mxu0 0.0
  %508 = vmatpush1.msra.mxu0 0.0
  %509 = vmatprep.subr.mxu0 0.0
  %510 = vmatpush1.msra.mxu0 0.0
  %511 = vmatprep.subr.mxu0 0.0
  %512 = vmatpush1.msra.mxu0 0.0
  %513 = vmatprep.subr.mxu0 0.0
  %514 = vmatpush1.msra.mxu0 0.0
  %515 = vmatprep.subr.mxu0 0.0
  %516 = vmatpush1.msra.mxu0 0.0
  %517 = vmatprep.subr.mxu0 0.0
  %518 = vmatpush1.msra.mxu0 0.0
  %519 = vmatprep.subr.mxu0 0.0
  %520 = vmatpush1.msra.mxu0 0.0
  %521 = vmatprep.subr.mxu0 0.0
  %522 = vmatpush1.msra.mxu0 0.0
  %523 = vmatprep.subr.mxu0 0.0
  %524 = vmatpush1.msra.mxu0 0.0
  %525 = vmatprep.subr.mxu0 0.0
  %526 = vmatpush1.msra.mxu0 0.0
  %527 = vmatprep.subr.mxu0 0.0
  %528 = vmatpush1.msra.mxu0 0.0
  %529 = vmatprep.subr.mxu0 0.0
  %530 = vmatpush1.msra.mxu0 0.0
  %531 = vmatprep.subr.mxu0 0.0
  %532 = vmatpush1.msra.mxu0 0.0
  %533 = vmatprep.subr.mxu0 0.0
  %534 = vmatpush1.msra.mxu0 0.0
  %535 = vmatprep.subr.mxu0 0.0
  %536 = vmatpush1.msra.mxu0 0.0
  %537 = vmatprep.subr.mxu0 0.0
  %538 = vmatpush1.msra.mxu0 0.0
  %539 = vmatprep.subr.mxu0 0.0
  %540 = vmatpush1.msra.mxu0 0.0
  %541 = vmatprep.subr.mxu0 0.0
  %542 = vmatpush1.msra.mxu0 0.0
  %543 = vmatprep.mubr.f32.mxu0 0.0
  %544 = vmatmul.mubr.f32.gmra.mrb[0].mxu0 %v471
  %v545 = vpop.f32.mrb[0].mxu0
  %v546 = vadd.f32 %v441, %v545
  %v547 = vpop.f32.mrb[0].mxu0
  %548 = vmatprep.mubr.f32.mxu0 0.0
  %549 = vmatmul.mubr.f32.gmra.mrb[0].mxu0 %v473
  %v550 = vpop.f32.mrb[0].mxu0
  %v551 = vadd.f32 %v446, %v550
  %v552 = vpop.f32.mrb[0].mxu0
  %553 = vmatprep.mubr.f32.mxu0 0.0
  %554 = vmatmul.mubr.f32.gmra.mrb[0].mxu0 %v475
  %v555 = vpop.f32.mrb[0].mxu0
  %v556 = vadd.f32 %v451, %v555
  %v557 = vpop.f32.mrb[0].mxu0
  %558 = vmatprep.mubr.f32.mxu0 0.0
  %559 = vmatmul.mubr.f32.gmra.mrb[0].mxu0 %v477
  %v560 = vpop.f32.mrb[0].mxu0
  %v561 = vadd.f32 %v456, %v560
  %v562 = vpop.f32.mrb[0].mxu0
  %563 = vdwg.mxu0
  %v564 = vld [vmem:[#allocation2 + $0x2] sm:$0xf]
  %v565 = vld [vmem:[#allocation2 + $0xa] sm:$0xf]
  %v566 = vld [vmem:[#allocation2 + $0x12] sm:$0xf]
  %v567 = vld [vmem:[#allocation2 + $0x1a] sm:$0xf]
  %v568 = vld [vmem:[#allocation2 + $0x32] sm:$0xf]
  %v569 = vld [vmem:[#allocation2 + $0x3a] sm:$0xf]
  %v570 = vld [vmem:[#allocation2 + $0x42] sm:$0xf]
  %v571 = vld [vmem:[#allocation2 + $0x4a] sm:$0xf]
  %s572 = scalar_lea.vmem %s3, 128
  %v573 = vld [vmem:[%s572] sm:$0xff]
  %v574 = vld [vmem:[%s572 + $0x8] sm:$0xff]
  %v575 = vld [vmem:[%s572 + $0x10] sm:$0xff]
  %v576 = vld [vmem:[%s572 + $0x18] sm:$0xff]
  %v577 = vld [vmem:[%s572 + $0x20] sm:$0xff]
  %v578 = vld [vmem:[%s572 + $0x28] sm:$0xff]
  %v579 = vld [vmem:[%s572 + $0x30] sm:$0xff]
  %v580 = vld [vmem:[%s572 + $0x38] sm:$0xff]
  %v589 = vcombine.low %v564, %v565
  %v590 = vcombine.low %v566, %v567
  %v591 = vcombine.low %v568, %v569
  %v592 = vcombine.low %v570, %v571
  %v593 = vsel %vm365, %v589, 0
  %v595 = vsel %vm365, %v590, 0
  %v597 = vsel %vm365, %v591, 0
  %v599 = vsel %vm365, %v592, 0
  %601 = vmatprep.subr.mxu0 0.0
  %602 = vmatpush1.msra.mxu0 %v573
  %603 = vmatprep.subr.mxu0 0.0
  %604 = vmatpush1.msra.mxu0 %v574
  %605 = vmatprep.subr.mxu0 0.0
  %606 = vmatpush1.msra.mxu0 %v575
  %607 = vmatprep.subr.mxu0 0.0
  %608 = vmatpush1.msra.mxu0 %v576
  %609 = vmatprep.subr.mxu0 0.0
  %610 = vmatpush1.msra.mxu0 %v577
  %611 = vmatprep.subr.mxu0 0.0
  %612 = vmatpush1.msra.mxu0 %v578
  %613 = vmatprep.subr.mxu0 0.0
  %614 = vmatpush1.msra.mxu0 %v579
  %615 = vmatprep.subr.mxu0 0.0
  %616 = vmatpush1.msra.mxu0 %v580
  %617 = vmatprep.subr.mxu0 0.0
  %618 = vmatpush1.msra.mxu0 0.0
  %619 = vmatprep.subr.mxu0 0.0
  %620 = vmatpush1.msra.mxu0 0.0
  %621 = vmatprep.subr.mxu0 0.0
  %622 = vmatpush1.msra.mxu0 0.0
  %623 = vmatprep.subr.mxu0 0.0
  %624 = vmatpush1.msra.mxu0 0.0
  %625 = vmatprep.subr.mxu0 0.0
  %626 = vmatpush1.msra.mxu0 0.0
  %627 = vmatprep.subr.mxu0 0.0
  %628 = vmatpush1.msra.mxu0 0.0
  %629 = vmatprep.subr.mxu0 0.0
  %630 = vmatpush1.msra.mxu0 0.0
  %631 = vmatprep.subr.mxu0 0.0
  %632 = vmatpush1.msra.mxu0 0.0
  %633 = vmatprep.subr.mxu0 0.0
  %634 = vmatpush1.msra.mxu0 0.0
  %635 = vmatprep.subr.mxu0 0.0
  %636 = vmatpush1.msra.mxu0 0.0
  %637 = vmatprep.subr.mxu0 0.0
  %638 = vmatpush1.msra.mxu0 0.0
  %639 = vmatprep.subr.mxu0 0.0
  %640 = vmatpush1.msra.mxu0 0.0
  %641 = vmatprep.subr.mxu0 0.0
  %642 = vmatpush1.msra.mxu0 0.0
  %643 = vmatprep.subr.mxu0 0.0
  %644 = vmatpush1.msra.mxu0 0.0
  %645 = vmatprep.subr.mxu0 0.0
  %646 = vmatpush1.msra.mxu0 0.0
  %647 = vmatprep.subr.mxu0 0.0
  %648 = vmatpush1.msra.mxu0 0.0
  %649 = vmatprep.subr.mxu0 0.0
  %650 = vmatpush1.msra.mxu0 0.0
  %651 = vmatprep.subr.mxu0 0.0
  %652 = vmatpush1.msra.mxu0 0.0
  %653 = vmatprep.subr.mxu0 0.0
  %654 = vmatpush1.msra.mxu0 0.0
  %655 = vmatprep.subr.mxu0 0.0
  %656 = vmatpush1.msra.mxu0 0.0
  %657 = vmatprep.subr.mxu0 0.0
  %658 = vmatpush1.msra.mxu0 0.0
  %659 = vmatprep.subr.mxu0 0.0
  %660 = vmatpush1.msra.mxu0 0.0
  %661 = vmatprep.subr.mxu0 0.0
  %662 = vmatpush1.msra.mxu0 0.0
  %663 = vmatprep.subr.mxu0 0.0
  %664 = vmatpush1.msra.mxu0 0.0
  %665 = vmatprep.mubr.f32.mxu0 0.0
  %666 = vmatmul.mubr.f32.gmra.mrb[0].mxu0 %v593
  %v667 = vpop.f32.mrb[0].mxu0
  %v668 = vadd.f32 0.0, %v667
  %v669 = vpop.f32.mrb[0].mxu0
  %670 = vmatprep.mubr.f32.mxu0 0.0
  %671 = vmatmul.mubr.f32.gmra.mrb[0].mxu0 %v595
  %v672 = vpop.f32.mrb[0].mxu0
  %v673 = vadd.f32 0.0, %v672
  %v674 = vpop.f32.mrb[0].mxu0
  %675 = vmatprep.mubr.f32.mxu0 0.0
  %676 = vmatmul.mubr.f32.gmra.mrb[0].mxu0 %v597
  %v677 = vpop.f32.mrb[0].mxu0
  %v678 = vadd.f32 0.0, %v677
  %v679 = vpop.f32.mrb[0].mxu0
  %680 = vmatprep.mubr.f32.mxu0 0.0
  %681 = vmatmul.mubr.f32.gmra.mrb[0].mxu0 %v599
  %v682 = vpop.f32.mrb[0].mxu0
  %v683 = vadd.f32 0.0, %v682
  %v684 = vpop.f32.mrb[0].mxu0
  %685 = vdwg.mxu0
  %v686 = vadd.f32 %v546, %v668
  %v687 = vadd.f32 %v551, %v673
  %v688 = vadd.f32 %v556, %v678
  %v689 = vadd.f32 %v561, %v683
  %v690 = vld [vmem:[%s310] sm:$0xf]
  %v691 = vld [vmem:[%s310 + $0x8] sm:$0xf]
  %v692 = vld [vmem:[%s310 + $0x10] sm:$0xf]
  %v693 = vld [vmem:[%s310 + $0x18] sm:$0xf]
  %v694 = vld [vmem:[%s310 + $0x30] sm:$0xf]
  %v695 = vld [vmem:[%s310 + $0x38] sm:$0xf]
  %v696 = vld [vmem:[%s310 + $0x40] sm:$0xf]
  %v697 = vld [vmem:[%s310 + $0x48] sm:$0xf]
  %s698 = scalar_lea.vmem %s3, 192
  %v699 = vld [vmem:[%s698] sm:$0xff]
  %v700 = vld [vmem:[%s698 + $0x8] sm:$0xff]
  %v701 = vld [vmem:[%s698 + $0x10] sm:$0xff]
  %v702 = vld [vmem:[%s698 + $0x18] sm:$0xff]
  %v703 = vld [vmem:[%s698 + $0x20] sm:$0xff]
  %v704 = vld [vmem:[%s698 + $0x28] sm:$0xff]
  %v705 = vld [vmem:[%s698 + $0x30] sm:$0xff]
  %v706 = vld [vmem:[%s698 + $0x38] sm:$0xff]
  %v715 = vcombine.low %v690, %v691
  %v716 = vcombine.low %v692, %v693
  %v717 = vcombine.low %v694, %v695
  %v718 = vcombine.low %v696, %v697
  %v719 = vsel %vm365, %v715, 0
  %v721 = vsel %vm365, %v716, 0
  %v723 = vsel %vm365, %v717, 0
  %v725 = vsel %vm365, %v718, 0
  %727 = vmatprep.subr.mxu0 0.0
  %728 = vmatpush1.msra.mxu0 %v699
  %729 = vmatprep.subr.mxu0 0.0
  %730 = vmatpush1.msra.mxu0 %v700
  %731 = vmatprep.subr.mxu0 0.0
  %732 = vmatpush1.msra.mxu0 %v701
  %733 = vmatprep.subr.mxu0 0.0
  %734 = vmatpush1.msra.mxu0 %v702
  %735 = vmatprep.subr.mxu0 0.0
  %736 = vmatpush1.msra.mxu0 %v703
  %737 = vmatprep.subr.mxu0 0.0
  %738 = vmatpush1.msra.mxu0 %v704
  %739 = vmatprep.subr.mxu0 0.0
  %740 = vmatpush1.msra.mxu0 %v705
  %741 = vmatprep.subr.mxu0 0.0
  %742 = vmatpush1.msra.mxu0 %v706
  %743 = vmatprep.subr.mxu0 0.0
  %744 = vmatpush1.msra.mxu0 0.0
  %745 = vmatprep.subr.mxu0 0.0
  %746 = vmatpush1.msra.mxu0 0.0
  %747 = vmatprep.subr.mxu0 0.0
  %748 = vmatpush1.msra.mxu0 0.0
  %749 = vmatprep.subr.mxu0 0.0
  %750 = vmatpush1.msra.mxu0 0.0
  %751 = vmatprep.subr.mxu0 0.0
  %752 = vmatpush1.msra.mxu0 0.0
  %753 = vmatprep.subr.mxu0 0.0
  %754 = vmatpush1.msra.mxu0 0.0
  %755 = vmatprep.subr.mxu0 0.0
  %756 = vmatpush1.msra.mxu0 0.0
  %757 = vmatprep.subr.mxu0 0.0
  %758 = vmatpush1.msra.mxu0 0.0
  %759 = vmatprep.subr.mxu0 0.0
  %760 = vmatpush1.msra.mxu0 0.0
  %761 = vmatprep.subr.mxu0 0.0
  %762 = vmatpush1.msra.mxu0 0.0
  %763 = vmatprep.subr.mxu0 0.0
  %764 = vmatpush1.msra.mxu0 0.0
  %765 = vmatprep.subr.mxu0 0.0
  %766 = vmatpush1.msra.mxu0 0.0
  %767 = vmatprep.subr.mxu0 0.0
  %768 = vmatpush1.msra.mxu0 0.0
  %769 = vmatprep.subr.mxu0 0.0
  %770 = vmatpush1.msra.mxu0 0.0
  %771 = vmatprep.subr.mxu0 0.0
  %772 = vmatpush1.msra.mxu0 0.0
  %773 = vmatprep.subr.mxu0 0.0
  %774 = vmatpush1.msra.mxu0 0.0
  %775 = vmatprep.subr.mxu0 0.0
  %776 = vmatpush1.msra.mxu0 0.0
  %777 = vmatprep.subr.mxu0 0.0
  %778 = vmatpush1.msra.mxu0 0.0
  %779 = vmatprep.subr.mxu0 0.0
  %780 = vmatpush1.msra.mxu0 0.0
  %781 = vmatprep.subr.mxu0 0.0
  %782 = vmatpush1.msra.mxu0 0.0
  %783 = vmatprep.subr.mxu0 0.0
  %784 = vmatpush1.msra.mxu0 0.0
  %785 = vmatprep.subr.mxu0 0.0
  %786 = vmatpush1.msra.mxu0 0.0
  %787 = vmatprep.subr.mxu0 0.0
  %788 = vmatpush1.msra.mxu0 0.0
  %789 = vmatprep.subr.mxu0 0.0
  %790 = vmatpush1.msra.mxu0 0.0
  %791 = vmatprep.mubr.f32.mxu0 0.0
  %792 = vmatmul.mubr.f32.gmra.mrb[0].mxu0 %v719
  %v793 = vpop.f32.mrb[0].mxu0
  %v794 = vadd.f32 0.0, %v793
  %v795 = vpop.f32.mrb[0].mxu0
  %796 = vmatprep.mubr.f32.mxu0 0.0
  %797 = vmatmul.mubr.f32.gmra.mrb[0].mxu0 %v721
  %v798 = vpop.f32.mrb[0].mxu0
  %v799 = vadd.f32 0.0, %v798
  %v800 = vpop.f32.mrb[0].mxu0
  %801 = vmatprep.mubr.f32.mxu0 0.0
  %802 = vmatmul.mubr.f32.gmra.mrb[0].mxu0 %v723
  %v803 = vpop.f32.mrb[0].mxu0
  %v804 = vadd.f32 0.0, %v803
  %v805 = vpop.f32.mrb[0].mxu0
  %806 = vmatprep.mubr.f32.mxu0 0.0
  %807 = vmatmul.mubr.f32.gmra.mrb[0].mxu0 %v725
  %v808 = vpop.f32.mrb[0].mxu0
  %v809 = vadd.f32 0.0, %v808
  %v810 = vpop.f32.mrb[0].mxu0
  %811 = vdwg.mxu0
  %v812 = vadd.f32 %v686, %v794
  %v813 = vadd.f32 %v687, %v799
  %v814 = vadd.f32 %v688, %v804
  %v815 = vadd.f32 %v689, %v809
  %v816 = vld [vmem:[%s310 + $0x1] sm:$0xf]
  %v817 = vld [vmem:[%s310 + $0x9] sm:$0xf]
  %v818 = vld [vmem:[%s310 + $0x11] sm:$0xf]
  %v819 = vld [vmem:[%s310 + $0x19] sm:$0xf]
  %v820 = vld [vmem:[%s310 + $0x31] sm:$0xf]
  %v821 = vld [vmem:[%s310 + $0x39] sm:$0xf]
  %v822 = vld [vmem:[%s310 + $0x41] sm:$0xf]
  %v823 = vld [vmem:[%s310 + $0x49] sm:$0xf]
  %s824 = scalar_lea.vmem %s3, 256
  %v825 = vld [vmem:[%s824] sm:$0xff]
  %v826 = vld [vmem:[%s824 + $0x8] sm:$0xff]
  %v827 = vld [vmem:[%s824 + $0x10] sm:$0xff]
  %v828 = vld [vmem:[%s824 + $0x18] sm:$0xff]
  %v829 = vld [vmem:[%s824 + $0x20] sm:$0xff]
  %v830 = vld [vmem:[%s824 + $0x28] sm:$0xff]
  %v831 = vld [vmem:[%s824 + $0x30] sm:$0xff]
  %v832 = vld [vmem:[%s824 + $0x38] sm:$0xff]
  %v841 = vcombine.low %v816, %v817
  %v842 = vcombine.low %v818, %v819
  %v843 = vcombine.low %v820, %v821
  %v844 = vcombine.low %v822, %v823
  %v845 = vsel %vm365, %v841, 0
  %v847 = vsel %vm365, %v842, 0
  %v849 = vsel %vm365, %v843, 0
  %v851 = vsel %vm365, %v844, 0
  %853 = vmatprep.subr.mxu0 0.0
  %854 = vmatpush1.msra.mxu0 %v825
  %855 = vmatprep.subr.mxu0 0.0
  %856 = vmatpush1.msra.mxu0 %v826
  %857 = vmatprep.subr.mxu0 0.0
  %858 = vmatpush1.msra.mxu0 %v827
  %859 = vmatprep.subr.mxu0 0.0
  %860 = vmatpush1.msra.mxu0 %v828
  %861 = vmatprep.subr.mxu0 0.0
  %862 = vmatpush1.msra.mxu0 %v829
  %863 = vmatprep.subr.mxu0 0.0
  %864 = vmatpush1.msra.mxu0 %v830
  %865 = vmatprep.subr.mxu0 0.0
  %866 = vmatpush1.msra.mxu0 %v831
  %867 = vmatprep.subr.mxu0 0.0
  %868 = vmatpush1.msra.mxu0 %v832
  %869 = vmatprep.subr.mxu0 0.0
  %870 = vmatpush1.msra.mxu0 0.0
  %871 = vmatprep.subr.mxu0 0.0
  %872 = vmatpush1.msra.mxu0 0.0
  %873 = vmatprep.subr.mxu0 0.0
  %874 = vmatpush1.msra.mxu0 0.0
  %875 = vmatprep.subr.mxu0 0.0
  %876 = vmatpush1.msra.mxu0 0.0
  %877 = vmatprep.subr.mxu0 0.0
  %878 = vmatpush1.msra.mxu0 0.0
  %879 = vmatprep.subr.mxu0 0.0
  %880 = vmatpush1.msra.mxu0 0.0
  %881 = vmatprep.subr.mxu0 0.0
  %882 = vmatpush1.msra.mxu0 0.0
  %883 = vmatprep.subr.mxu0 0.0
  %884 = vmatpush1.msra.mxu0 0.0
  %885 = vmatprep.subr.mxu0 0.0
  %886 = vmatpush1.msra.mxu0 0.0
  %887 = vmatprep.subr.mxu0 0.0
  %888 = vmatpush1.msra.mxu0 0.0
  %889 = vmatprep.subr.mxu0 0.0
  %890 = vmatpush1.msra.mxu0 0.0
  %891 = vmatprep.subr.mxu0 0.0
  %892 = vmatpush1.msra.mxu0 0.0
  %893 = vmatprep.subr.mxu0 0.0
  %894 = vmatpush1.msra.mxu0 0.0
  %895 = vmatprep.subr.mxu0 0.0
  %896 = vmatpush1.msra.mxu0 0.0
  %897 = vmatprep.subr.mxu0 0.0
  %898 = vmatpush1.msra.mxu0 0.0
  %899 = vmatprep.subr.mxu0 0.0
  %900 = vmatpush1.msra.mxu0 0.0
  %901 = vmatprep.subr.mxu0 0.0
  %902 = vmatpush1.msra.mxu0 0.0
  %903 = vmatprep.subr.mxu0 0.0
  %904 = vmatpush1.msra.mxu0 0.0
  %905 = vmatprep.subr.mxu0 0.0
  %906 = vmatpush1.msra.mxu0 0.0
  %907 = vmatprep.subr.mxu0 0.0
  %908 = vmatpush1.msra.mxu0 0.0
  %909 = vmatprep.subr.mxu0 0.0
  %910 = vmatpush1.msra.mxu0 0.0
  %911 = vmatprep.subr.mxu0 0.0
  %912 = vmatpush1.msra.mxu0 0.0
  %913 = vmatprep.subr.mxu0 0.0
  %914 = vmatpush1.msra.mxu0 0.0
  %915 = vmatprep.subr.mxu0 0.0
  %916 = vmatpush1.msra.mxu0 0.0
  %917 = vmatprep.mubr.f32.mxu0 0.0
  %918 = vmatmul.mubr.f32.gmra.mrb[0].mxu0 %v845
  %v919 = vpop.f32.mrb[0].mxu0
  %v920 = vadd.f32 0.0, %v919
  %v921 = vpop.f32.mrb[0].mxu0
  %922 = vmatprep.mubr.f32.mxu0 0.0
  %923 = vmatmul.mubr.f32.gmra.mrb[0].mxu0 %v847
  %v924 = vpop.f32.mrb[0].mxu0
  %v925 = vadd.f32 0.0, %v924
  %v926 = vpop.f32.mrb[0].mxu0
  %927 = vmatprep.mubr.f32.mxu0 0.0
  %928 = vmatmul.mubr.f32.gmra.mrb[0].mxu0 %v849
  %v929 = vpop.f32.mrb[0].mxu0
  %v930 = vadd.f32 0.0, %v929
  %v931 = vpop.f32.mrb[0].mxu0
  %932 = vmatprep.mubr.f32.mxu0 0.0
  %933 = vmatmul.mubr.f32.gmra.mrb[0].mxu0 %v851
  %v934 = vpop.f32.mrb[0].mxu0
  %v935 = vadd.f32 0.0, %v934
  %v936 = vpop.f32.mrb[0].mxu0
  %937 = vdwg.mxu0
  %v938 = vadd.f32 %v812, %v920
  %v939 = vadd.f32 %v813, %v925
  %v940 = vadd.f32 %v814, %v930
  %v941 = vadd.f32 %v815, %v935
  %v942 = vld [vmem:[%s310 + $0x2] sm:$0xf]
  %v943 = vld [vmem:[%s310 + $0xa] sm:$0xf]
  %v944 = vld [vmem:[%s310 + $0x12] sm:$0xf]
  %v945 = vld [vmem:[%s310 + $0x1a] sm:$0xf]
  %v946 = vld [vmem:[%s310 + $0x32] sm:$0xf]
  %v947 = vld [vmem:[%s310 + $0x3a] sm:$0xf]
  %v948 = vld [vmem:[%s310 + $0x42] sm:$0xf]
  %v949 = vld [vmem:[%s310 + $0x4a] sm:$0xf]
  %s950 = scalar_lea.vmem %s3, 320
  %v951 = vld [vmem:[%s950] sm:$0xff]
  %v952 = vld [vmem:[%s950 + $0x8] sm:$0xff]
  %v953 = vld [vmem:[%s950 + $0x10] sm:$0xff]
  %v954 = vld [vmem:[%s950 + $0x18] sm:$0xff]
  %v955 = vld [vmem:[%s950 + $0x20] sm:$0xff]
  %v956 = vld [vmem:[%s950 + $0x28] sm:$0xff]
  %v957 = vld [vmem:[%s950 + $0x30] sm:$0xff]
  %v958 = vld [vmem:[%s950 + $0x38] sm:$0xff]
  %v967 = vcombine.low %v942, %v943
  %v968 = vcombine.low %v944, %v945
  %v969 = vcombine.low %v946, %v947
  %v970 = vcombine.low %v948, %v949
  %v971 = vsel %vm365, %v967, 0
  %v973 = vsel %vm365, %v968, 0
  %v975 = vsel %vm365, %v969, 0
  %v977 = vsel %vm365, %v970, 0
  %979 = vmatprep.subr.mxu0 0.0
  %980 = vmatpush1.msra.mxu0 %v951
  %981 = vmatprep.subr.mxu0 0.0
  %982 = vmatpush1.msra.mxu0 %v952
  %983 = vmatprep.subr.mxu0 0.0
  %984 = vmatpush1.msra.mxu0 %v953
  %985 = vmatprep.subr.mxu0 0.0
  %986 = vmatpush1.msra.mxu0 %v954
  %987 = vmatprep.subr.mxu0 0.0
  %988 = vmatpush1.msra.mxu0 %v955
  %989 = vmatprep.subr.mxu0 0.0
  %990 = vmatpush1.msra.mxu0 %v956
  %991 = vmatprep.subr.mxu0 0.0
  %992 = vmatpush1.msra.mxu0 %v957
  %993 = vmatprep.subr.mxu0 0.0
  %994 = vmatpush1.msra.mxu0 %v958
  %995 = vmatprep.subr.mxu0 0.0
  %996 = vmatpush1.msra.mxu0 0.0
  %997 = vmatprep.subr.mxu0 0.0
  %998 = vmatpush1.msra.mxu0 0.0
  %999 = vmatprep.subr.mxu0 0.0
  %1000 = vmatpush1.msra.mxu0 0.0
  %1001 = vmatprep.subr.mxu0 0.0
  %1002 = vmatpush1.msra.mxu0 0.0
  %1003 = vmatprep.subr.mxu0 0.0
  %1004 = vmatpush1.msra.mxu0 0.0
  %1005 = vmatprep.subr.mxu0 0.0
  %1006 = vmatpush1.msra.mxu0 0.0
  %1007 = vmatprep.subr.mxu0 0.0
  %1008 = vmatpush1.msra.mxu0 0.0
  %1009 = vmatprep.subr.mxu0 0.0
  %1010 = vmatpush1.msra.mxu0 0.0
  %1011 = vmatprep.subr.mxu0 0.0
  %1012 = vmatpush1.msra.mxu0 0.0
  %1013 = vmatprep.subr.mxu0 0.0
  %1014 = vmatpush1.msra.mxu0 0.0
  %1015 = vmatprep.subr.mxu0 0.0
  %1016 = vmatpush1.msra.mxu0 0.0
  %1017 = vmatprep.subr.mxu0 0.0
  %1018 = vmatpush1.msra.mxu0 0.0
  %1019 = vmatprep.subr.mxu0 0.0
  %1020 = vmatpush1.msra.mxu0 0.0
  %1021 = vmatprep.subr.mxu0 0.0
  %1022 = vmatpush1.msra.mxu0 0.0
  %1023 = vmatprep.subr.mxu0 0.0
  %1024 = vmatpush1.msra.mxu0 0.0
  %1025 = vmatprep.subr.mxu0 0.0
  %1026 = vmatpush1.msra.mxu0 0.0
  %1027 = vmatprep.subr.mxu0 0.0
  %1028 = vmatpush1.msra.mxu0 0.0
  %1029 = vmatprep.subr.mxu0 0.0
  %1030 = vmatpush1.msra.mxu0 0.0
  %1031 = vmatprep.subr.mxu0 0.0
  %1032 = vmatpush1.msra.mxu0 0.0
  %1033 = vmatprep.subr.mxu0 0.0
  %1034 = vmatpush1.msra.mxu0 0.0
  %1035 = vmatprep.subr.mxu0 0.0
  %1036 = vmatpush1.msra.mxu0 0.0
  %1037 = vmatprep.subr.mxu0 0.0
  %1038 = vmatpush1.msra.mxu0 0.0
  %1039 = vmatprep.subr.mxu0 0.0
  %1040 = vmatpush1.msra.mxu0 0.0
  %1041 = vmatprep.subr.mxu0 0.0
  %1042 = vmatpush1.msra.mxu0 0.0
  %1043 = vmatprep.mubr.f32.mxu0 0.0
  %1044 = vmatmul.mubr.f32.gmra.mrb[0].mxu0 %v971
  %v1045 = vpop.f32.mrb[0].mxu0
  %v1046 = vadd.f32 0.0, %v1045
  %v1047 = vpop.f32.mrb[0].mxu0
  %1048 = vmatprep.mubr.f32.mxu0 0.0
  %1049 = vmatmul.mubr.f32.gmra.mrb[0].mxu0 %v973
  %v1050 = vpop.f32.mrb[0].mxu0
  %v1051 = vadd.f32 0.0, %v1050
  %v1052 = vpop.f32.mrb[0].mxu0
  %1053 = vmatprep.mubr.f32.mxu0 0.0
  %1054 = vmatmul.mubr.f32.gmra.mrb[0].mxu0 %v975
  %v1055 = vpop.f32.mrb[0].mxu0
  %v1056 = vadd.f32 0.0, %v1055
  %v1057 = vpop.f32.mrb[0].mxu0
  %1058 = vmatprep.mubr.f32.mxu0 0.0
  %1059 = vmatmul.mubr.f32.gmra.mrb[0].mxu0 %v977
  %v1060 = vpop.f32.mrb[0].mxu0
  %v1061 = vadd.f32 0.0, %v1060
  %v1062 = vpop.f32.mrb[0].mxu0
  %1063 = vdwg.mxu0
  %v1064 = vadd.f32 %v938, %v1046
  %v1065 = vadd.f32 %v939, %v1051
  %v1066 = vadd.f32 %v940, %v1056
  %v1067 = vadd.f32 %v941, %v1061
  %s1068 = scalar_lea.vmem [#allocation2], 16
  %v1069 = vld [vmem:[%s1068] sm:$0xf]
  %v1070 = vld [vmem:[%s1068 + $0x8] sm:$0xf]
  %v1071 = vld [vmem:[%s1068 + $0x10] sm:$0xf]
  %v1072 = vld [vmem:[%s1068 + $0x18] sm:$0xf]
  %v1073 = vld [vmem:[%s1068 + $0x30] sm:$0xf]
  %v1074 = vld [vmem:[%s1068 + $0x38] sm:$0xf]
  %v1075 = vld [vmem:[%s1068 + $0x40] sm:$0xf]
  %v1076 = vld [vmem:[%s1068 + $0x48] sm:$0xf]
  %s1077 = scalar_lea.vmem %s3, 384
  %v1078 = vld [vmem:[%s1077] sm:$0xff]
  %v1079 = vld [vmem:[%s1077 + $0x8] sm:$0xff]
  %v1080 = vld [vmem:[%s1077 + $0x10] sm:$0xff]
  %v1081 = vld [vmem:[%s1077 + $0x18] sm:$0xff]
  %v1082 = vld [vmem:[%s1077 + $0x20] sm:$0xff]
  %v1083 = vld [vmem:[%s1077 + $0x28] sm:$0xff]
  %v1084 = vld [vmem:[%s1077 + $0x30] sm:$0xff]
  %v1085 = vld [vmem:[%s1077 + $0x38] sm:$0xff]
  %v1094 = vcombine.low %v1069, %v1070
  %v1095 = vcombine.low %v1071, %v1072
  %v1096 = vcombine.low %v1073, %v1074
  %v1097 = vcombine.low %v1075, %v1076
  %v1098 = vsel %vm365, %v1094, 0
  %v1100 = vsel %vm365, %v1095, 0
  %v1102 = vsel %vm365, %v1096, 0
  %v1104 = vsel %vm365, %v1097, 0
  %1106 = vmatprep.subr.mxu0 0.0
  %1107 = vmatpush1.msra.mxu0 %v1078
  %1108 = vmatprep.subr.mxu0 0.0
  %1109 = vmatpush1.msra.mxu0 %v1079
  %1110 = vmatprep.subr.mxu0 0.0
  %1111 = vmatpush1.msra.mxu0 %v1080
  %1112 = vmatprep.subr.mxu0 0.0
  %1113 = vmatpush1.msra.mxu0 %v1081
  %1114 = vmatprep.subr.mxu0 0.0
  %1115 = vmatpush1.msra.mxu0 %v1082
  %1116 = vmatprep.subr.mxu0 0.0
  %1117 = vmatpush1.msra.mxu0 %v1083
  %1118 = vmatprep.subr.mxu0 0.0
  %1119 = vmatpush1.msra.mxu0 %v1084
  %1120 = vmatprep.subr.mxu0 0.0
  %1121 = vmatpush1.msra.mxu0 %v1085
  %1122 = vmatprep.subr.mxu0 0.0
  %1123 = vmatpush1.msra.mxu0 0.0
  %1124 = vmatprep.subr.mxu0 0.0
  %1125 = vmatpush1.msra.mxu0 0.0
  %1126 = vmatprep.subr.mxu0 0.0
  %1127 = vmatpush1.msra.mxu0 0.0
  %1128 = vmatprep.subr.mxu0 0.0
  %1129 = vmatpush1.msra.mxu0 0.0
  %1130 = vmatprep.subr.mxu0 0.0
  %1131 = vmatpush1.msra.mxu0 0.0
  %1132 = vmatprep.subr.mxu0 0.0
  %1133 = vmatpush1.msra.mxu0 0.0
  %1134 = vmatprep.subr.mxu0 0.0
  %1135 = vmatpush1.msra.mxu0 0.0
  %1136 = vmatprep.subr.mxu0 0.0
  %1137 = vmatpush1.msra.mxu0 0.0
  %1138 = vmatprep.subr.mxu0 0.0
  %1139 = vmatpush1.msra.mxu0 0.0
  %1140 = vmatprep.subr.mxu0 0.0
  %1141 = vmatpush1.msra.mxu0 0.0
  %1142 = vmatprep.subr.mxu0 0.0
  %1143 = vmatpush1.msra.mxu0 0.0
  %1144 = vmatprep.subr.mxu0 0.0
  %1145 = vmatpush1.msra.mxu0 0.0
  %1146 = vmatprep.subr.mxu0 0.0
  %1147 = vmatpush1.msra.mxu0 0.0
  %1148 = vmatprep.subr.mxu0 0.0
  %1149 = vmatpush1.msra.mxu0 0.0
  %1150 = vmatprep.subr.mxu0 0.0
  %1151 = vmatpush1.msra.mxu0 0.0
  %1152 = vmatprep.subr.mxu0 0.0
  %1153 = vmatpush1.msra.mxu0 0.0
  %1154 = vmatprep.subr.mxu0 0.0
  %1155 = vmatpush1.msra.mxu0 0.0
  %1156 = vmatprep.subr.mxu0 0.0
  %1157 = vmatpush1.msra.mxu0 0.0
  %1158 = vmatprep.subr.mxu0 0.0
  %1159 = vmatpush1.msra.mxu0 0.0
  %1160 = vmatprep.subr.mxu0 0.0
  %1161 = vmatpush1.msra.mxu0 0.0
  %1162 = vmatprep.subr.mxu0 0.0
  %1163 = vmatpush1.msra.mxu0 0.0
  %1164 = vmatprep.subr.mxu0 0.0
  %1165 = vmatpush1.msra.mxu0 0.0
  %1166 = vmatprep.subr.mxu0 0.0
  %1167 = vmatpush1.msra.mxu0 0.0
  %1168 = vmatprep.subr.mxu0 0.0
  %1169 = vmatpush1.msra.mxu0 0.0
  %1170 = vmatprep.mubr.f32.mxu0 0.0
  %1171 = vmatmul.mubr.f32.gmra.mrb[0].mxu0 %v1098
  %v1172 = vpop.f32.mrb[0].mxu0
  %v1173 = vadd.f32 0.0, %v1172
  %v1174 = vpop.f32.mrb[0].mxu0
  %1175 = vmatprep.mubr.f32.mxu0 0.0
  %1176 = vmatmul.mubr.f32.gmra.mrb[0].mxu0 %v1100
  %v1177 = vpop.f32.mrb[0].mxu0
  %v1178 = vadd.f32 0.0, %v1177
  %v1179 = vpop.f32.mrb[0].mxu0
  %1180 = vmatprep.mubr.f32.mxu0 0.0
  %1181 = vmatmul.mubr.f32.gmra.mrb[0].mxu0 %v1102
  %v1182 = vpop.f32.mrb[0].mxu0
  %v1183 = vadd.f32 0.0, %v1182
  %v1184 = vpop.f32.mrb[0].mxu0
  %1185 = vmatprep.mubr.f32.mxu0 0.0
  %1186 = vmatmul.mubr.f32.gmra.mrb[0].mxu0 %v1104
  %v1187 = vpop.f32.mrb[0].mxu0
  %v1188 = vadd.f32 0.0, %v1187
  %v1189 = vpop.f32.mrb[0].mxu0
  %1190 = vdwg.mxu0
  %v1191 = vadd.f32 %v1064, %v1173
  %v1192 = vadd.f32 %v1065, %v1178
  %v1193 = vadd.f32 %v1066, %v1183
  %v1194 = vadd.f32 %v1067, %v1188
  %v1195 = vld [vmem:[%s1068 + $0x1] sm:$0xf]
  %v1196 = vld [vmem:[%s1068 + $0x9] sm:$0xf]
  %v1197 = vld [vmem:[%s1068 + $0x11] sm:$0xf]
  %v1198 = vld [vmem:[%s1068 + $0x19] sm:$0xf]
  %v1199 = vld [vmem:[%s1068 + $0x31] sm:$0xf]
  %v1200 = vld [vmem:[%s1068 + $0x39] sm:$0xf]
  %v1201 = vld [vmem:[%s1068 + $0x41] sm:$0xf]
  %v1202 = vld [vmem:[%s1068 + $0x49] sm:$0xf]
  %s1203 = scalar_lea.vmem %s3, 448
  %v1204 = vld [vmem:[%s1203] sm:$0xff]
  %v1205 = vld [vmem:[%s1203 + $0x8] sm:$0xff]
  %v1206 = vld [vmem:[%s1203 + $0x10] sm:$0xff]
  %v1207 = vld [vmem:[%s1203 + $0x18] sm:$0xff]
  %v1208 = vld [vmem:[%s1203 + $0x20] sm:$0xff]
  %v1209 = vld [vmem:[%s1203 + $0x28] sm:$0xff]
  %v1210 = vld [vmem:[%s1203 + $0x30] sm:$0xff]
  %v1211 = vld [vmem:[%s1203 + $0x38] sm:$0xff]
  %v1220 = vcombine.low %v1195, %v1196
  %v1221 = vcombine.low %v1197, %v1198
  %v1222 = vcombine.low %v1199, %v1200
  %v1223 = vcombine.low %v1201, %v1202
  %v1224 = vsel %vm365, %v1220, 0
  %v1226 = vsel %vm365, %v1221, 0
  %v1228 = vsel %vm365, %v1222, 0
  %v1230 = vsel %vm365, %v1223, 0
  %1232 = vmatprep.subr.mxu0 0.0
  %1233 = vmatpush1.msra.mxu0 %v1204
  %1234 = vmatprep.subr.mxu0 0.0
  %1235 = vmatpush1.msra.mxu0 %v1205
  %1236 = vmatprep.subr.mxu0 0.0
  %1237 = vmatpush1.msra.mxu0 %v1206
  %1238 = vmatprep.subr.mxu0 0.0
  %1239 = vmatpush1.msra.mxu0 %v1207
  %1240 = vmatprep.subr.mxu0 0.0
  %1241 = vmatpush1.msra.mxu0 %v1208
  %1242 = vmatprep.subr.mxu0 0.0
  %1243 = vmatpush1.msra.mxu0 %v1209
  %1244 = vmatprep.subr.mxu0 0.0
  %1245 = vmatpush1.msra.mxu0 %v1210
  %1246 = vmatprep.subr.mxu0 0.0
  %1247 = vmatpush1.msra.mxu0 %v1211
  %1248 = vmatprep.subr.mxu0 0.0
  %1249 = vmatpush1.msra.mxu0 0.0
  %1250 = vmatprep.subr.mxu0 0.0
  %1251 = vmatpush1.msra.mxu0 0.0
  %1252 = vmatprep.subr.mxu0 0.0
  %1253 = vmatpush1.msra.mxu0 0.0
  %1254 = vmatprep.subr.mxu0 0.0
  %1255 = vmatpush1.msra.mxu0 0.0
  %1256 = vmatprep.subr.mxu0 0.0
  %1257 = vmatpush1.msra.mxu0 0.0
  %1258 = vmatprep.subr.mxu0 0.0
  %1259 = vmatpush1.msra.mxu0 0.0
  %1260 = vmatprep.subr.mxu0 0.0
  %1261 = vmatpush1.msra.mxu0 0.0
  %1262 = vmatprep.subr.mxu0 0.0
  %1263 = vmatpush1.msra.mxu0 0.0
  %1264 = vmatprep.subr.mxu0 0.0
  %1265 = vmatpush1.msra.mxu0 0.0
  %1266 = vmatprep.subr.mxu0 0.0
  %1267 = vmatpush1.msra.mxu0 0.0
  %1268 = vmatprep.subr.mxu0 0.0
  %1269 = vmatpush1.msra.mxu0 0.0
  %1270 = vmatprep.subr.mxu0 0.0
  %1271 = vmatpush1.msra.mxu0 0.0
  %1272 = vmatprep.subr.mxu0 0.0
  %1273 = vmatpush1.msra.mxu0 0.0
  %1274 = vmatprep.subr.mxu0 0.0
  %1275 = vmatpush1.msra.mxu0 0.0
  %1276 = vmatprep.subr.mxu0 0.0
  %1277 = vmatpush1.msra.mxu0 0.0
  %1278 = vmatprep.subr.mxu0 0.0
  %1279 = vmatpush1.msra.mxu0 0.0
  %1280 = vmatprep.subr.mxu0 0.0
  %1281 = vmatpush1.msra.mxu0 0.0
  %1282 = vmatprep.subr.mxu0 0.0
  %1283 = vmatpush1.msra.mxu0 0.0
  %1284 = vmatprep.subr.mxu0 0.0
  %1285 = vmatpush1.msra.mxu0 0.0
  %1286 = vmatprep.subr.mxu0 0.0
  %1287 = vmatpush1.msra.mxu0 0.0
  %1288 = vmatprep.subr.mxu0 0.0
  %1289 = vmatpush1.msra.mxu0 0.0
  %1290 = vmatprep.subr.mxu0 0.0
  %1291 = vmatpush1.msra.mxu0 0.0
  %1292 = vmatprep.subr.mxu0 0.0
  %1293 = vmatpush1.msra.mxu0 0.0
  %1294 = vmatprep.subr.mxu0 0.0
  %1295 = vmatpush1.msra.mxu0 0.0
  %1296 = vmatprep.mubr.f32.mxu0 0.0
  %1297 = vmatmul.mubr.f32.gmra.mrb[0].mxu0 %v1224
  %v1298 = vpop.f32.mrb[0].mxu0
  %v1299 = vadd.f32 0.0, %v1298
  %v1300 = vpop.f32.mrb[0].mxu0
  %1301 = vmatprep.mubr.f32.mxu0 0.0
  %1302 = vmatmul.mubr.f32.gmra.mrb[0].mxu0 %v1226
  %v1303 = vpop.f32.mrb[0].mxu0
  %v1304 = vadd.f32 0.0, %v1303
  %v1305 = vpop.f32.mrb[0].mxu0
  %1306 = vmatprep.mubr.f32.mxu0 0.0
  %1307 = vmatmul.mubr.f32.gmra.mrb[0].mxu0 %v1228
  %v1308 = vpop.f32.mrb[0].mxu0
  %v1309 = vadd.f32 0.0, %v1308
  %v1310 = vpop.f32.mrb[0].mxu0
  %1311 = vmatprep.mubr.f32.mxu0 0.0
  %1312 = vmatmul.mubr.f32.gmra.mrb[0].mxu0 %v1230
  %v1313 = vpop.f32.mrb[0].mxu0
  %v1314 = vadd.f32 0.0, %v1313
  %v1315 = vpop.f32.mrb[0].mxu0
  %1316 = vdwg.mxu0
  %v1317 = vadd.f32 %v1191, %v1299
  %v1318 = vadd.f32 %v1192, %v1304
  %v1319 = vadd.f32 %v1193, %v1309
  %v1320 = vadd.f32 %v1194, %v1314
  %v1321 = vld [vmem:[%s1068 + $0x2] sm:$0xf]
  %v1322 = vld [vmem:[%s1068 + $0xa] sm:$0xf]
  %v1323 = vld [vmem:[%s1068 + $0x12] sm:$0xf]
  %v1324 = vld [vmem:[%s1068 + $0x1a] sm:$0xf]
  %v1325 = vld [vmem:[%s1068 + $0x32] sm:$0xf]
  %v1326 = vld [vmem:[%s1068 + $0x3a] sm:$0xf]
  %v1327 = vld [vmem:[%s1068 + $0x42] sm:$0xf]
  %v1328 = vld [vmem:[%s1068 + $0x4a] sm:$0xf]
  %s1329 = scalar_lea.vmem %s3, 512
  %v1330 = vld [vmem:[%s1329] sm:$0xff]
  %v1331 = vld [vmem:[%s1329 + $0x8] sm:$0xff]
  %v1332 = vld [vmem:[%s1329 + $0x10] sm:$0xff]
  %v1333 = vld [vmem:[%s1329 + $0x18] sm:$0xff]
  %v1334 = vld [vmem:[%s1329 + $0x20] sm:$0xff]
  %v1335 = vld [vmem:[%s1329 + $0x28] sm:$0xff]
  %v1336 = vld [vmem:[%s1329 + $0x30] sm:$0xff]
  %v1337 = vld [vmem:[%s1329 + $0x38] sm:$0xff]
  %v1346 = vcombine.low %v1321, %v1322
  %v1347 = vcombine.low %v1323, %v1324
  %v1348 = vcombine.low %v1325, %v1326
  %v1349 = vcombine.low %v1327, %v1328
  %v1350 = vsel %vm365, %v1346, 0
  %v1352 = vsel %vm365, %v1347, 0
  %v1354 = vsel %vm365, %v1348, 0
  %v1356 = vsel %vm365, %v1349, 0
  %1358 = vmatprep.subr.mxu0 0.0
  %1359 = vmatpush1.msra.mxu0 %v1330
  %1360 = vmatprep.subr.mxu0 0.0
  %1361 = vmatpush1.msra.mxu0 %v1331
  %1362 = vmatprep.subr.mxu0 0.0
  %1363 = vmatpush1.msra.mxu0 %v1332
  %1364 = vmatprep.subr.mxu0 0.0
  %1365 = vmatpush1.msra.mxu0 %v1333
  %1366 = vmatprep.subr.mxu0 0.0
  %1367 = vmatpush1.msra.mxu0 %v1334
  %1368 = vmatprep.subr.mxu0 0.0
  %1369 = vmatpush1.msra.mxu0 %v1335
  %1370 = vmatprep.subr.mxu0 0.0
  %1371 = vmatpush1.msra.mxu0 %v1336
  %1372 = vmatprep.subr.mxu0 0.0
  %1373 = vmatpush1.msra.mxu0 %v1337
  %1374 = vmatprep.subr.mxu0 0.0
  %1375 = vmatpush1.msra.mxu0 0.0
  %1376 = vmatprep.subr.mxu0 0.0
  %1377 = vmatpush1.msra.mxu0 0.0
  %1378 = vmatprep.subr.mxu0 0.0
  %1379 = vmatpush1.msra.mxu0 0.0
  %1380 = vmatprep.subr.mxu0 0.0
  %1381 = vmatpush1.msra.mxu0 0.0
  %1382 = vmatprep.subr.mxu0 0.0
  %1383 = vmatpush1.msra.mxu0 0.0
  %1384 = vmatprep.subr.mxu0 0.0
  %1385 = vmatpush1.msra.mxu0 0.0
  %1386 = vmatprep.subr.mxu0 0.0
  %1387 = vmatpush1.msra.mxu0 0.0
  %1388 = vmatprep.subr.mxu0 0.0
  %1389 = vmatpush1.msra.mxu0 0.0
  %1390 = vmatprep.subr.mxu0 0.0
  %1391 = vmatpush1.msra.mxu0 0.0
  %1392 = vmatprep.subr.mxu0 0.0
  %1393 = vmatpush1.msra.mxu0 0.0
  %1394 = vmatprep.subr.mxu0 0.0
  %1395 = vmatpush1.msra.mxu0 0.0
  %1396 = vmatprep.subr.mxu0 0.0
  %1397 = vmatpush1.msra.mxu0 0.0
  %1398 = vmatprep.subr.mxu0 0.0
  %1399 = vmatpush1.msra.mxu0 0.0
  %1400 = vmatprep.subr.mxu0 0.0
  %1401 = vmatpush1.msra.mxu0 0.0
  %1402 = vmatprep.subr.mxu0 0.0
  %1403 = vmatpush1.msra.mxu0 0.0
  %1404 = vmatprep.subr.mxu0 0.0
  %1405 = vmatpush1.msra.mxu0 0.0
  %1406 = vmatprep.subr.mxu0 0.0
  %1407 = vmatpush1.msra.mxu0 0.0
  %1408 = vmatprep.subr.mxu0 0.0
  %1409 = vmatpush1.msra.mxu0 0.0
  %1410 = vmatprep.subr.mxu0 0.0
  %1411 = vmatpush1.msra.mxu0 0.0
  %1412 = vmatprep.subr.mxu0 0.0
  %1413 = vmatpush1.msra.mxu0 0.0
  %1414 = vmatprep.subr.mxu0 0.0
  %1415 = vmatpush1.msra.mxu0 0.0
  %1416 = vmatprep.subr.mxu0 0.0
  %1417 = vmatpush1.msra.mxu0 0.0
  %1418 = vmatprep.subr.mxu0 0.0
  %1419 = vmatpush1.msra.mxu0 0.0
  %1420 = vmatprep.subr.mxu0 0.0
  %1421 = vmatpush1.msra.mxu0 0.0
  %1422 = vmatprep.mubr.f32.mxu0 0.0
  %1423 = vmatmul.mubr.f32.gmra.mrb[0].mxu0 %v1350
  %v1424 = vpop.f32.mrb[0].mxu0
  %v1425 = vadd.f32 0.0, %v1424
  %v1426 = vpop.f32.mrb[0].mxu0
  %1427 = vmatprep.mubr.f32.mxu0 0.0
  %1428 = vmatmul.mubr.f32.gmra.mrb[0].mxu0 %v1352
  %v1429 = vpop.f32.mrb[0].mxu0
  %v1430 = vadd.f32 0.0, %v1429
  %v1431 = vpop.f32.mrb[0].mxu0
  %1432 = vmatprep.mubr.f32.mxu0 0.0
  %1433 = vmatmul.mubr.f32.gmra.mrb[0].mxu0 %v1354
  %v1434 = vpop.f32.mrb[0].mxu0
  %v1435 = vadd.f32 0.0, %v1434
  %v1436 = vpop.f32.mrb[0].mxu0
  %1437 = vmatprep.mubr.f32.mxu0 0.0
  %1438 = vmatmul.mubr.f32.gmra.mrb[0].mxu0 %v1356
  %v1439 = vpop.f32.mrb[0].mxu0
  %v1440 = vadd.f32 0.0, %v1439
  %v1441 = vpop.f32.mrb[0].mxu0
  %1442 = vdwg.mxu0
  %v1443 = vadd.f32 %v1317, %v1425
  %v1444 = vadd.f32 %v1318, %v1430
  %v1445 = vadd.f32 %v1319, %v1435
  %v1446 = vadd.f32 %v1320, %v1440
  %v1451 = vcombine.high %v1443, %v1443
  %v1453 = vunpack.c.l.s4 1983009808
  %v1454 = vunpack.c.0.s8 %v1453
  %v1455 = vlaneseq
  %v1456 = vshrl.u32 %v1455, 7
  %v1457 = vsub.s32 %v1454, %v1456
  %v1458 = vrot.slane %v1443, %v1457
  %v1460 = vunpack.c.l.s4 1983009808
  %v1461 = vunpack.c.0.s8 %v1460
  %v1462 = vlaneseq
  %v1463 = vshrl.u32 %v1462, 7
  %v1464 = vsub.s32 %v1461, %v1463
  %v1465 = vrot.slane %v1451, %v1464
  %v1466 = vcombine.high %v1458, %v1458
  %v1467 = vcombine.high %v1465, %v1465
  %v1468 = vcombine.high %v1444, %v1444
  %v1470 = vunpack.c.l.s4 1983009808
  %v1471 = vunpack.c.0.s8 %v1470
  %v1472 = vlaneseq
  %v1473 = vshrl.u32 %v1472, 7
  %v1474 = vsub.s32 %v1471, %v1473
  %v1475 = vrot.slane %v1444, %v1474
  %v1477 = vunpack.c.l.s4 1983009808
  %v1478 = vunpack.c.0.s8 %v1477
  %v1479 = vlaneseq
  %v1480 = vshrl.u32 %v1479, 7
  %v1481 = vsub.s32 %v1478, %v1480
  %v1482 = vrot.slane %v1468, %v1481
  %v1483 = vcombine.high %v1475, %v1475
  %v1484 = vcombine.high %v1482, %v1482
  %v1485 = vcombine.high %v1445, %v1445
  %v1487 = vunpack.c.l.s4 1983009808
  %v1488 = vunpack.c.0.s8 %v1487
  %v1489 = vlaneseq
  %v1490 = vshrl.u32 %v1489, 7
  %v1491 = vsub.s32 %v1488, %v1490
  %v1492 = vrot.slane %v1445, %v1491
  %v1494 = vunpack.c.l.s4 1983009808
  %v1495 = vunpack.c.0.s8 %v1494
  %v1496 = vlaneseq
  %v1497 = vshrl.u32 %v1496, 7
  %v1498 = vsub.s32 %v1495, %v1497
  %v1499 = vrot.slane %v1485, %v1498
  %v1500 = vcombine.high %v1492, %v1492
  %v1501 = vcombine.high %v1499, %v1499
  %v1502 = vcombine.high %v1446, %v1446
  %v1504 = vunpack.c.l.s4 1983009808
  %v1505 = vunpack.c.0.s8 %v1504
  %v1506 = vlaneseq
  %v1507 = vshrl.u32 %v1506, 7
  %v1508 = vsub.s32 %v1505, %v1507
  %v1509 = vrot.slane %v1446, %v1508
  %v1511 = vunpack.c.l.s4 1983009808
  %v1512 = vunpack.c.0.s8 %v1511
  %v1513 = vlaneseq
  %v1514 = vshrl.u32 %v1513, 7
  %v1515 = vsub.s32 %v1512, %v1514
  %v1516 = vrot.slane %v1502, %v1515
  %v1517 = vcombine.high %v1509, %v1509
  %v1518 = vcombine.high %v1516, %v1516
  %v1535 = vrot.slane %v1458, 7
  %v1536 = vrot.slane %v1535, 2
  %v1537 = vrot.slane %v1466, 7
  %v1538 = vrot.slane %v1537, 2
  %v1539 = vrot.slane %v1465, 7
  %v1540 = vrot.slane %v1539, 2
  %v1541 = vrot.slane %v1467, 7
  %v1542 = vrot.slane %v1541, 2
  %v1543 = vrot.slane %v1475, 7
  %v1544 = vrot.slane %v1543, 2
  %v1545 = vrot.slane %v1483, 7
  %v1546 = vrot.slane %v1545, 2
  %v1547 = vrot.slane %v1482, 7
  %v1548 = vrot.slane %v1547, 2
  %v1549 = vrot.slane %v1484, 7
  %v1550 = vrot.slane %v1549, 2
  %v1551 = vrot.slane %v1492, 7
  %v1552 = vrot.slane %v1551, 2
  %v1553 = vrot.slane %v1500, 7
  %v1554 = vrot.slane %v1553, 2
  %v1555 = vrot.slane %v1499, 7
  %v1556 = vrot.slane %v1555, 2
  %v1557 = vrot.slane %v1501, 7
  %v1558 = vrot.slane %v1557, 2
  %v1559 = vrot.slane %v1509, 7
  %v1560 = vrot.slane %v1559, 2
  %v1561 = vrot.slane %v1517, 7
  %v1562 = vrot.slane %v1561, 2
  %v1563 = vrot.slane %v1516, 7
  %v1564 = vrot.slane %v1563, 2
  %v1565 = vrot.slane %v1518, 7
  %v1566 = vrot.slane %v1565, 2
  %v1583 = vmax.f32 %v1458, %v1536
  %v1584 = vmax.f32 %v1466, %v1538
  %v1585 = vmax.f32 %v1465, %v1540
  %v1586 = vmax.f32 %v1467, %v1542
  %v1587 = vmax.f32 %v1475, %v1544
  %v1588 = vmax.f32 %v1483, %v1546
  %v1589 = vmax.f32 %v1482, %v1548
  %v1590 = vmax.f32 %v1484, %v1550
  %v1591 = vmax.f32 %v1492, %v1552
  %v1592 = vmax.f32 %v1500, %v1554
  %v1593 = vmax.f32 %v1499, %v1556
  %v1594 = vmax.f32 %v1501, %v1558
  %v1595 = vmax.f32 %v1509, %v1560
  %v1596 = vmax.f32 %v1517, %v1562
  %v1597 = vmax.f32 %v1516, %v1564
  %v1598 = vmax.f32 %v1518, %v1566
  %v1599 = vmax.f32 %v1583, %v1585
  %v1600 = vmax.f32 %v1584, %v1586
  %v1601 = vmax.f32 %v1587, %v1589
  %v1602 = vmax.f32 %v1588, %v1590
  %v1603 = vmax.f32 %v1591, %v1593
  %v1604 = vmax.f32 %v1592, %v1594
  %v1605 = vmax.f32 %v1595, %v1597
  %v1606 = vmax.f32 %v1596, %v1598
  %v1607 = vld [vmem:[%s4] sm:$0x1]
  %v1609 = vlaneseq
  %v1610 = vshrl.u32 %v1609, 7
  %v1611 = vsub.s32 0, %v1610
  %v1612 = vrot.slane %v1607, %v1611
  %v1613 = vcombine.high %v1612, %v1612
  %v1615 = vunpack.c.l.s4 1983009808
  %v1616 = vunpack.c.0.s8 %v1615
  %v1617 = vlaneseq
  %v1618 = vshrl.u32 %v1617, 7
  %v1619 = vsub.s32 %v1616, %v1618
  %v1620 = vrot.slane %v1612, %v1619
  %v1622 = vunpack.c.l.s4 1983009808
  %v1623 = vunpack.c.0.s8 %v1622
  %v1624 = vlaneseq
  %v1625 = vshrl.u32 %v1624, 7
  %v1626 = vsub.s32 %v1623, %v1625
  %v1627 = vrot.slane %v1613, %v1626
  %v1628 = vcombine.high %v1620, %v1620
  %v1629 = vcombine.high %v1627, %v1627
  %v1630 = vrot.slane %v1620, 1
  %v1631 = vrot.slane %v1628, 1
  %v1632 = vrot.slane %v1627, 1
  %v1633 = vrot.slane %v1629, 1
  %v1642 = vadd.f32 %v1599, %v1620
  %v1643 = vadd.f32 %v1600, %v1630
  %v1644 = vadd.f32 %v1601, %v1628
  %v1645 = vadd.f32 %v1602, %v1631
  %v1646 = vadd.f32 %v1603, %v1627
  %v1647 = vadd.f32 %v1604, %v1632
  %v1648 = vadd.f32 %v1605, %v1629
  %v1649 = vadd.f32 %v1606, %v1633
  %v1650 = vmax.f32 %v1642, 0.0
  %v1651 = vmax.f32 %v1643, 0.0
  %v1652 = vmax.f32 %v1644, 0.0
  %v1653 = vmax.f32 %v1645, 0.0
  %v1654 = vmax.f32 %v1646, 0.0
  %v1655 = vmax.f32 %v1647, 0.0
  %v1656 = vmax.f32 %v1648, 0.0
  %v1657 = vmax.f32 %v1649, 0.0
  %v1658 = vld [vmem:[%s5] sm:$0xff]
  %v1659 = vld [vmem:[%s5 + $0x8] sm:$0xff]
  %v1660 = vld [vmem:[%s5 + $0x10] sm:$0xff]
  %v1661 = vld [vmem:[%s5 + $0x18] sm:$0xff]
  %v1662 = vld [vmem:[%s6] sm:$0x1]
  %v1664 = vlaneseq
  %v1665 = vshrl.u32 %v1664, 7
  %v1666 = vsub.s32 0, %v1665
  %v1667 = vrot.slane %v1662, %v1666
  %v1677 = vlaneseq
  %v1678 = vshrl.u32 %v1677, 7
  %v1679 = vsub.s32 0, %v1678
  %v1680 = vrot.slane %v1650, %v1679
  %v1681 = vlaneseq
  %v1682 = vshrl.u32 %v1681, 7
  %v1683 = vsub.s32 0, %v1682
  %v1684 = vrot.slane %v1651, %v1683
  %v1685 = vlaneseq
  %v1686 = vshrl.u32 %v1685, 7
  %v1687 = vsub.s32 0, %v1686
  %v1688 = vrot.slane %v1652, %v1687
  %v1689 = vlaneseq
  %v1690 = vshrl.u32 %v1689, 7
  %v1691 = vsub.s32 0, %v1690
  %v1692 = vrot.slane %v1653, %v1691
  %v1693 = vlaneseq
  %v1694 = vshrl.u32 %v1693, 7
  %v1695 = vsub.s32 0, %v1694
  %v1696 = vrot.slane %v1654, %v1695
  %v1697 = vlaneseq
  %v1698 = vshrl.u32 %v1697, 7
  %v1699 = vsub.s32 0, %v1698
  %v1700 = vrot.slane %v1655, %v1699
  %v1701 = vlaneseq
  %v1702 = vshrl.u32 %v1701, 7
  %v1703 = vsub.s32 0, %v1702
  %v1704 = vrot.slane %v1656, %v1703
  %v1705 = vlaneseq
  %v1706 = vshrl.u32 %v1705, 7
  %v1707 = vsub.s32 0, %v1706
  %v1708 = vrot.slane %v1657, %v1707
  %vm1709 = vcmask 1041409
  %v1710 = vsel %vm1709, %v1684, %v1680
  %vm1711 = vcmask 1042434
  %v1712 = vsel %vm1711, %v1688, %v1710
  %vm1713 = vcmask 1043459
  %v1714 = vsel %vm1713, %v1692, %v1712
  %vm1715 = vcmask 1044484
  %v1716 = vsel %vm1715, %v1696, %v1714
  %vm1717 = vcmask 1045509
  %v1718 = vsel %vm1717, %v1700, %v1716
  %vm1719 = vcmask 1046534
  %v1720 = vsel %vm1719, %v1704, %v1718
  %vm1721 = vcmask 1047559
  %v1722 = vsel %vm1721, %v1708, %v1720
  %vm1723 = vcmask 261120
  %v1724 = vsel %vm1723, %v1722, 0
  %1726 = vmatprep.subr.mxu0 0.0
  %1727 = vmatpush1.msra.mxu0 %v1658
  %1728 = vmatprep.subr.mxu0 0.0
  %1729 = vmatpush1.msra.mxu0 %v1659
  %1730 = vmatprep.subr.mxu0 0.0
  %1731 = vmatpush1.msra.mxu0 %v1660
  %1732 = vmatprep.subr.mxu0 0.0
  %1733 = vmatpush1.msra.mxu0 %v1661
  %1734 = vmatprep.subr.mxu0 0.0
  %1735 = vmatpush1.msra.mxu0 0.0
  %1736 = vmatprep.subr.mxu0 0.0
  %1737 = vmatpush1.msra.mxu0 0.0
  %1738 = vmatprep.subr.mxu0 0.0
  %1739 = vmatpush1.msra.mxu0 0.0
  %1740 = vmatprep.subr.mxu0 0.0
  %1741 = vmatpush1.msra.mxu0 0.0
  %1742 = vmatprep.subr.mxu0 0.0
  %1743 = vmatpush1.msra.mxu0 0.0
  %1744 = vmatprep.subr.mxu0 0.0
  %1745 = vmatpush1.msra.mxu0 0.0
  %1746 = vmatprep.subr.mxu0 0.0
  %1747 = vmatpush1.msra.mxu0 0.0
  %1748 = vmatprep.subr.mxu0 0.0
  %1749 = vmatpush1.msra.mxu0 0.0
  %1750 = vmatprep.subr.mxu0 0.0
  %1751 = vmatpush1.msra.mxu0 0.0
  %1752 = vmatprep.subr.mxu0 0.0
  %1753 = vmatpush1.msra.mxu0 0.0
  %1754 = vmatprep.subr.mxu0 0.0
  %1755 = vmatpush1.msra.mxu0 0.0
  %1756 = vmatprep.subr.mxu0 0.0
  %1757 = vmatpush1.msra.mxu0 0.0
  %1758 = vmatprep.subr.mxu0 0.0
  %1759 = vmatpush1.msra.mxu0 0.0
  %1760 = vmatprep.subr.mxu0 0.0
  %1761 = vmatpush1.msra.mxu0 0.0
  %1762 = vmatprep.subr.mxu0 0.0
  %1763 = vmatpush1.msra.mxu0 0.0
  %1764 = vmatprep.subr.mxu0 0.0
  %1765 = vmatpush1.msra.mxu0 0.0
  %1766 = vmatprep.subr.mxu0 0.0
  %1767 = vmatpush1.msra.mxu0 0.0
  %1768 = vmatprep.subr.mxu0 0.0
  %1769 = vmatpush1.msra.mxu0 0.0
  %1770 = vmatprep.subr.mxu0 0.0
  %1771 = vmatpush1.msra.mxu0 0.0
  %1772 = vmatprep.subr.mxu0 0.0
  %1773 = vmatpush1.msra.mxu0 0.0
  %1774 = vmatprep.subr.mxu0 0.0
  %1775 = vmatpush1.msra.mxu0 0.0
  %1776 = vmatprep.subr.mxu0 0.0
  %1777 = vmatpush1.msra.mxu0 0.0
  %1778 = vmatprep.subr.mxu0 0.0
  %1779 = vmatpush1.msra.mxu0 0.0
  %1780 = vmatprep.subr.mxu0 0.0
  %1781 = vmatpush1.msra.mxu0 0.0
  %1782 = vmatprep.subr.mxu0 0.0
  %1783 = vmatpush1.msra.mxu0 0.0
  %1784 = vmatprep.subr.mxu0 0.0
  %1785 = vmatpush1.msra.mxu0 0.0
  %1786 = vmatprep.subr.mxu0 0.0
  %1787 = vmatpush1.msra.mxu0 0.0
  %1788 = vmatprep.subr.mxu0 0.0
  %1789 = vmatpush1.msra.mxu0 0.0
  %1790 = vmatprep.mubr.f32.mxu0 0.0
  %1791 = vmatmul.mubr.f32.gmra.mrb[0].mxu0 %v1724
  %v1792 = vpop.f32.mrb[0].mxu0
  %v1793 = vadd.f32 %v1667, %v1792
  %v1794 = vpop.f32.mrb[0].mxu0
  %1795 = vdwg.mxu0
  %v1796 = vld [vmem:[%s7] sm:$0xff]
  %1798 = vrot.lane.b32.xlu0 %v1793, 112
  %v1799 = vpop.permute.xlu0 %1798
  %vm1800 = vcmask 130048
  %v1801 = vsel %vm1800, %v1793, 0
  %v1803 = vsel %vm1800, %v1799, 0
  %1805 = vmatprep.subr.mxu0 0.0
  %1806 = vmatpush1.xpose.msra.mxu0 %v1803
  %1807 = vmatprep.subr.mxu0 0.0
  %1808 = vmatpush1.xpose.msra.mxu0 0.0
  %1809 = vmatprep.subr.mxu0 0.0
  %1810 = vmatpush1.xpose.msra.mxu0 0.0
  %1811 = vmatprep.subr.mxu0 0.0
  %1812 = vmatpush1.xpose.msra.mxu0 0.0
  %1813 = vmatprep.subr.mxu0 0.0
  %1814 = vmatpush1.xpose.msra.mxu0 0.0
  %1815 = vmatprep.subr.mxu0 0.0
  %1816 = vmatpush1.xpose.msra.mxu0 0.0
  %1817 = vmatprep.subr.mxu0 0.0
  %1818 = vmatpush1.xpose.msra.mxu0 0.0
  %1819 = vmatprep.subr.mxu0 0.0
  %1820 = vmatpush1.xpose.msra.mxu0 0.0
  %1821 = vmatprep.subr.mxu0 0.0
  %1822 = vmatpush1.xpose.msra.mxu0 0.0
  %1823 = vmatprep.subr.mxu0 0.0
  %1824 = vmatpush1.xpose.msra.mxu0 0.0
  %1825 = vmatprep.subr.mxu0 0.0
  %1826 = vmatpush1.xpose.msra.mxu0 0.0
  %1827 = vmatprep.subr.mxu0 0.0
  %1828 = vmatpush1.xpose.msra.mxu0 0.0
  %1829 = vmatprep.subr.mxu0 0.0
  %1830 = vmatpush1.xpose.msra.mxu0 0.0
  %1831 = vmatprep.subr.mxu0 0.0
  %1832 = vmatpush1.xpose.msra.mxu0 0.0
  %1833 = vmatprep.subr.mxu0 0.0
  %1834 = vmatpush1.xpose.msra.mxu0 0.0
  %1835 = vmatprep.subr.mxu0 0.0
  %1836 = vmatpush1.xpose.msra.mxu0 0.0
  %1837 = vmatprep.subr.mxu0 0.0
  %1838 = vmatpush1.xpose.msra.mxu0 0.0
  %1839 = vmatprep.subr.mxu0 0.0
  %1840 = vmatpush1.xpose.msra.mxu0 0.0
  %1841 = vmatprep.subr.mxu0 0.0
  %1842 = vmatpush1.xpose.msra.mxu0 0.0
  %1843 = vmatprep.subr.mxu0 0.0
  %1844 = vmatpush1.xpose.msra.mxu0 0.0
  %1845 = vmatprep.subr.mxu0 0.0
  %1846 = vmatpush1.xpose.msra.mxu0 0.0
  %1847 = vmatprep.subr.mxu0 0.0
  %1848 = vmatpush1.xpose.msra.mxu0 0.0
  %1849 = vmatprep.subr.mxu0 0.0
  %1850 = vmatpush1.xpose.msra.mxu0 0.0
  %1851 = vmatprep.subr.mxu0 0.0
  %1852 = vmatpush1.xpose.msra.mxu0 0.0
  %1853 = vmatprep.subr.mxu0 0.0
  %1854 = vmatpush1.xpose.msra.mxu0 0.0
  %1855 = vmatprep.subr.mxu0 0.0
  %1856 = vmatpush1.xpose.msra.mxu0 0.0
  %1857 = vmatprep.subr.mxu0 0.0
  %1858 = vmatpush1.xpose.msra.mxu0 0.0
  %1859 = vmatprep.subr.mxu0 0.0
  %1860 = vmatpush1.xpose.msra.mxu0 0.0
  %1861 = vmatprep.subr.mxu0 0.0
  %1862 = vmatpush1.xpose.msra.mxu0 0.0
  %1863 = vmatprep.subr.mxu0 0.0
  %1864 = vmatpush1.xpose.msra.mxu0 0.0
  %1865 = vmatprep.subr.mxu0 0.0
  %1866 = vmatpush1.xpose.msra.mxu0 0.0
  %1867 = vmatprep.subr.mxu0 0.0
  %1868 = vmatpush1.xpose.msra.mxu0 0.0
  %1869 = vmatprep.mubr.f32.mxu0 0.0
  %1870 = vmatmul.mubr.f32.gmra.mrb[0].mxu0 %v1801
  %v1871 = vpop.f32.mrb[0].mxu0
  %v1872 = vadd.f32 %v1796, %v1871
  %v1873 = vpop.f32.mrb[0].mxu0
  %1874 = vdwg.mxu0
  %vm1875 = vcmask 64512
  %v1876 = vsel %vm1875, %v1872, -inf
  %1877 = vmax.xlane.f32.xlu0 %v1876
  %v1878 = vpop.xlane.xlu0 %1877
  %v1879 = vsub.f32 %v1872, %v1878
  %v1880 = vmul.f32 %v1879, 1.442695
  %v1881 = vpow.pop %v1880
  %v1882 = vsel %vm1875, %v1881, 0.0
  %1883 = vadd.xlane.f32.xlu0 %v1882
  %v1884 = vpop.xlane.xlu0 %1883
  %v1885 = vrcp.pop %v1884
  %v1886 = vmul.f32 %v1881, %v1885
  %1887 = vrot.lane.b32.xlu0 %v1793, 96
  %v1888 = vpop.permute.xlu0 %1887
  %v1891 = vsel %vm1875, %v1886, 0
  %1893 = vmatprep.subr.mxu0 0.0
  %1894 = vmatpush1.msra.mxu0 %v1888
  %1895 = vmatprep.subr.mxu0 0.0
  %1896 = vmatpush1.msra.mxu0 0.0
  %1897 = vmatprep.subr.mxu0 0.0
  %1898 = vmatpush1.msra.mxu0 0.0
  %1899 = vmatprep.subr.mxu0 0.0
  %1900 = vmatpush1.msra.mxu0 0.0
  %1901 = vmatprep.subr.mxu0 0.0
  %1902 = vmatpush1.msra.mxu0 0.0
  %1903 = vmatprep.subr.mxu0 0.0
  %1904 = vmatpush1.msra.mxu0 0.0
  %1905 = vmatprep.subr.mxu0 0.0
  %1906 = vmatpush1.msra.mxu0 0.0
  %1907 = vmatprep.subr.mxu0 0.0
  %1908 = vmatpush1.msra.mxu0 0.0
  %1909 = vmatprep.subr.mxu0 0.0
  %1910 = vmatpush1.msra.mxu0 0.0
  %1911 = vmatprep.subr.mxu0 0.0
  %1912 = vmatpush1.msra.mxu0 0.0
  %1913 = vmatprep.subr.mxu0 0.0
  %1914 = vmatpush1.msra.mxu0 0.0
  %1915 = vmatprep.subr.mxu0 0.0
  %1916 = vmatpush1.msra.mxu0 0.0
  %1917 = vmatprep.subr.mxu0 0.0
  %1918 = vmatpush1.msra.mxu0 0.0
  %1919 = vmatprep.subr.mxu0 0.0
  %1920 = vmatpush1.msra.mxu0 0.0
  %1921 = vmatprep.subr.mxu0 0.0
  %1922 = vmatpush1.msra.mxu0 0.0
  %1923 = vmatprep.subr.mxu0 0.0
  %1924 = vmatpush1.msra.mxu0 0.0
  %1925 = vmatprep.subr.mxu0 0.0
  %1926 = vmatpush1.msra.mxu0 0.0
  %1927 = vmatprep.subr.mxu0 0.0
  %1928 = vmatpush1.msra.mxu0 0.0
  %1929 = vmatprep.subr.mxu0 0.0
  %1930 = vmatpush1.msra.mxu0 0.0
  %1931 = vmatprep.subr.mxu0 0.0
  %1932 = vmatpush1.msra.mxu0 0.0
  %1933 = vmatprep.subr.mxu0 0.0
  %1934 = vmatpush1.msra.mxu0 0.0
  %1935 = vmatprep.subr.mxu0 0.0
  %1936 = vmatpush1.msra.mxu0 0.0
  %1937 = vmatprep.subr.mxu0 0.0
  %1938 = vmatpush1.msra.mxu0 0.0
  %1939 = vmatprep.subr.mxu0 0.0
  %1940 = vmatpush1.msra.mxu0 0.0
  %1941 = vmatprep.subr.mxu0 0.0
  %1942 = vmatpush1.msra.mxu0 0.0
  %1943 = vmatprep.subr.mxu0 0.0
  %1944 = vmatpush1.msra.mxu0 0.0
  %1945 = vmatprep.subr.mxu0 0.0
  %1946 = vmatpush1.msra.mxu0 0.0
  %1947 = vmatprep.subr.mxu0 0.0
  %1948 = vmatpush1.msra.mxu0 0.0
  %1949 = vmatprep.subr.mxu0 0.0
  %1950 = vmatpush1.msra.mxu0 0.0
  %1951 = vmatprep.subr.mxu0 0.0
  %1952 = vmatpush1.msra.mxu0 0.0
  %1953 = vmatprep.subr.mxu0 0.0
  %1954 = vmatpush1.msra.mxu0 0.0
  %1955 = vmatprep.subr.mxu0 0.0
  %1956 = vmatpush1.msra.mxu0 0.0
  %1957 = vmatprep.mubr.f32.mxu0 0.0
  %1958 = vmatmul.mubr.f32.gmra.mrb[0].mxu0 %v1891
  %v1959 = vpop.f32.mrb[0].mxu0
  %v1960 = vadd.f32 0.0, %v1959
  %v1961 = vpop.f32.mrb[0].mxu0
  %1962 = vdwg.mxu0
  %v1963 = vld [vmem:[%s8] sm:$0xff]
  %v1964 = vmul.f32 %v1960, %v1963
  %v1965 = vsel %vm1723, %v1964, 0.0
  %1966 = vadd.xlane.f32.xlu0 %v1965
  %v1967 = vpop.xlane.xlu0 %1966
  %v1970 = vunpack.c.l.s4 839922192
  %v1971 = vunpack.c.0.s8 %v1970
  %v1972 = vlaneseq
  %v1973 = vshrl.u32 %v1972, 7
  %v1974 = vsub.s32 %v1971, %v1973
  %v1975 = vrot.slane %v1967, %v1974
  %v1977 = vunpack.c.l.s4 1985246804
  %v1978 = vunpack.c.0.s8 %v1977
  %v1979 = vlaneseq
  %v1980 = vshrl.u32 %v1979, 7
  %v1981 = vsub.s32 %v1978, %v1980
  %v1982 = vrot.slane %v1967, %v1981
  %1983 = vset.pattern.permute.xlu0 0
  %1984 = vperm.xlu0 %1983, %v1975
  %v1985 = vpop.permute.xlu0 %1984
  %1986 = vset.pattern.permute.xlu0 0
  %1987 = vperm.xlu0 %1986, %v1982
  %v1988 = vpop.permute.xlu0 %1987
  %v1989 = vlaneseq
  %v1990 = vand.u32 %v1989, 127
  %v1991 = vlaneseq
  %v1992 = vshrl.u32 %v1991, 7
  %v1993 = vsub.s32 %v1990, %v1992
  %v1994 = vrot.slane %v1985, %v1993
  %v1995 = vlaneseq
  %v1996 = vshrl.u32 %v1995, 7
  %v1997 = vsub.s32 %v1990, %v1996
  %v1998 = vrot.slane %v1988, %v1997
  %v1999 = vsel %vm1709, %v1998, %v1994
  %vm2001 = vcmask 25600
  %v2002 = vsel %vm2001, %v1999, 0.0
  %2003 = vadd.xlane.f32.xlu0 %v2002
  %v2004 = vpop.xlane.xlu0 %2003
  %v2005 = vld [vmem:[#allocation3] sm:$0x1]
  %v2007 = vlaneseq
  %v2008 = vshrl.u32 %v2007, 7
  %v2009 = vsub.s32 0, %v2008
  %v2010 = vrot.slane %v2005, %v2009
  %v2012 = vadd.f32 %v2004, %v2010
  %v2013 = vsub.f32 0.0, %v2012
  %v2014 = vmul.f32 %v2013, 1.442695
  %v2015 = vpow.pop %v2014
  %v2016 = vadd.f32 %v2015, 1.0
  %v2017 = vrcp.pop %v2016
  %v2018 = vmul.f32 1.0, %v2017
  %vm2019 = vcmask 1024
  %2020 = vst.msk [vmem:[%s10] sm:$0x3] %vm2019, %v2018
  // Predicated region
  $region42: #{cnn_with_attention_forward.1} parent=0 // pred_check
    _
  $region43: #{cnn_with_attention_forward.1} parent=0 // pred_check_branch
    %2022 = sbr.rel (0) target = $region45
  $region44: #{cnn_with_attention_forward.1} parent=0 // pred_region
    _
  $region45: #{cnn_with_attention_forward.1} parent=0 // pred_fallthru
    _
  // Predicated region
  $region46: #{cnn_with_attention_forward.1} parent=0 // pred_check
    _
  $region47: #{cnn_with_attention_forward.1} parent=0 // pred_check_branch
    %2024 = sbr.rel (0) target = $region49
  $region48: #{cnn_with_attention_forward.1} parent=0 // pred_region
    _
  $region49: #{cnn_with_attention_forward.1} parent=0 // pred_fallthru
    _

</llo_original>
